<compile_context>
chip_gen: v7x
topology: tpu7x:2x2x1
jax: 0.10.0
libtpu: 0.0.40
codegen_flags: <defaults>
</compile_context>

<pallas_src>
import functools
import math

import jax
import jax.numpy as jnp
from jax.experimental import pallas as pl
from jax.experimental.pallas import tpu as pltpu


def _round_up(n, m):
    return ((n + m - 1) // m) * m


def _pick_block(n, candidates):
    """Largest candidate (multiple of 8) dividing n, else the full extent."""
    if n % 8 != 0:
        return n
    for cand in candidates:
        if n % cand == 0:
            return cand
    return n


def _pad2(a, rows, cols):
    return jnp.pad(a, ((0, rows - a.shape[0]), (0, cols - a.shape[1])))


# ---------------------------------------------------------------------------
# Fused kernel: GaussianNoise + stacked tanh RNN (batch_first, h0=0) + Linear
# ---------------------------------------------------------------------------

def _rnn_fc_kernel(*refs, num_layers, stddev, with_noise, matmul_dtype):
    pos = 0
    x_ref = refs[pos]; pos += 1
    noise_ref = None
    if with_noise:
        noise_ref = refs[pos]; pos += 1
    w_refs = refs[pos:pos + 3 * num_layers]; pos += 3 * num_layers
    w_fc_ref, b_fc_ref, out_ref, h_ref, xc_ref, act_ref = refs[pos:pos + 6]

    tb = pl.program_id(1)

    # Reset the carried per-layer hidden states at the first time block.
    @pl.when(tb == 0)
    def _():
        h_ref[...] = jnp.zeros_like(h_ref)

    x = x_ref[...].astype(jnp.float32)                    # (bb, tt, in)
    if with_noise:
        x = x + noise_ref[...].astype(jnp.float32) * stddev
    bb, tt, in_dim = x.shape

    inp2 = x.reshape(bb * tt, in_dim)                     # batch-major rows (layer 0)
    rows_batch_major = True
    unroll = True if tt <= 32 else 8

    h_out = None
    for l in range(num_layers):
        w_ih_t = w_refs[3 * l][...]                       # (in, Hp)  matmul dtype
        w_hh_t = w_refs[3 * l + 1][...]                   # (Hp, Hp)  matmul dtype
        bias = w_refs[3 * l + 2][...]                     # (1, Hp)   f32
        hp = w_hh_t.shape[0]

        # Whole-block input contribution: one big MXU matmul, bias hoisted
        # out of the sequential time loop.
        xc = jnp.dot(inp2.astype(matmul_dtype), w_ih_t,
                     preferred_element_type=jnp.float32) + bias
        if rows_batch_major:
            # Layer-0 rows are (b, t)-ordered; make them time-major once
            # (lane dim stays put -> cheap XLU/sublane shuffle).
            xc = jnp.transpose(xc.reshape(bb, tt, hp), (1, 0, 2))
        else:
            xc = xc.reshape(tt, bb, hp)
        xc_ref[...] = xc                                  # (tt, bb, Hp)

        last_layer = l == num_layers - 1

        def step(t, h, *, w_hh_t=w_hh_t, write=not last_layer):
            pre = xc_ref[t] + jnp.dot(h.astype(matmul_dtype), w_hh_t,
                                      preferred_element_type=jnp.float32)
            h_new = jnp.tanh(pre)
            if write:
                act_ref[t] = h_new                        # next layer's input
            return h_new

        h_out = jax.lax.fori_loop(0, tt, step, h_ref[l], unroll=unroll)
        h_ref[l] = h_out                                  # carry across time blocks

        if not last_layer:
            inp2 = act_ref[...].reshape(tt * bb, hp)      # already time-major
            rows_batch_major = False

    # fc(out[:, -1, :]) -- only the last time block writes the output.
    @pl.when(tb == pl.num_programs(1) - 1)
    def _():
        logits = (jnp.dot(h_out.astype(matmul_dtype), w_fc_ref[...],
                          preferred_element_type=jnp.float32) + b_fc_ref[...])
        out_ref[...] = logits.astype(out_ref.dtype)


def rnn_fc(x, layer_params, fc_w, fc_b, *, noise=None, stddev=0.0,
           matmul_dtype=jnp.bfloat16, batch_block=None, time_block=None):
    """GaussianNoise (optional) + nn.RNN(tanh, batch_first) + fc(out[:, -1])."""
    B, T, I = x.shape
    num_layers = len(layer_params)
    H = layer_params[0][0].shape[0]
    C = fc_w.shape[0]
    Hp = _round_up(H, 128)                                # lane-dense hidden

    bb = batch_block if batch_block is not None else _pick_block(B, (128, 64, 32, 16, 8))
    tt = time_block if time_block is not None else _pick_block(T, (64, 32, 16, 8))
    assert B % bb == 0 and T % tt == 0

    with_noise = noise is not None
    inputs = [x]
    in_specs = [pl.BlockSpec((bb, tt, I), lambda i, t: (i, t, 0))]
    if with_noise:
        inputs.append(noise.astype(x.dtype))
        in_specs.append(pl.BlockSpec((bb, tt, I), lambda i, t: (i, t, 0)))

    vmem_spec = pl.BlockSpec(memory_space=pltpu.MemorySpace.VMEM)
    for l, (w_ih, w_hh, b_ih, b_hh) in enumerate(layer_params):
        in_dim = w_ih.shape[1]
        in_dim_p = in_dim if l == 0 else Hp               # layers>0 consume padded h
        inputs.append(_pad2(w_ih.T, in_dim_p, Hp).astype(matmul_dtype))
        inputs.append(_pad2(w_hh.T, Hp, Hp).astype(matmul_dtype))
        inputs.append(_pad2((b_ih + b_hh).reshape(1, H), 1, Hp).astype(jnp.float32))
        in_specs += [vmem_spec] * 3
    inputs.append(_pad2(fc_w.T, Hp, C).astype(matmul_dtype))
    inputs.append(fc_b.reshape(1, C).astype(jnp.float32))
    in_specs += [vmem_spec] * 2

    kernel = functools.partial(
        _rnn_fc_kernel, num_layers=num_layers, stddev=float(stddev),
        with_noise=with_noise, matmul_dtype=matmul_dtype)

    return pl.pallas_call(
        kernel,
        out_shape=jax.ShapeDtypeStruct((B, C), x.dtype),
        grid=(B // bb, T // tt),
        in_specs=in_specs,
        out_specs=pl.BlockSpec((bb, C), lambda i, t: (i, 0)),
        scratch_shapes=[
            pltpu.VMEM((num_layers, bb, Hp), jnp.float32),   # per-layer h carry
            pltpu.VMEM((tt, bb, Hp), jnp.float32),           # input contributions
            pltpu.VMEM((tt, bb, Hp), jnp.float32),           # layer activations
        ],
        compiler_params=pltpu.CompilerParams(
            dimension_semantics=("parallel", "arbitrary")),
    )(*inputs)


def rnn_forward(x, layer_params, fc_w, fc_b, *, stddev, noise=None,
                training=True, matmul_dtype=jnp.bfloat16,
                batch_block=None, time_block=None):
    """Full RNN.forward: GaussianNoise -> stacked RNN -> fc, one fused kernel."""
    if training and noise is None:
        raise ValueError("training mode requires a noise array")
    return rnn_fc(x, layer_params, fc_w, fc_b,
                  noise=noise if training else None,
                  stddev=stddev if training else 0.0,
                  matmul_dtype=matmul_dtype,
                  batch_block=batch_block, time_block=time_block)


# ---------------------------------------------------------------------------
# Pure-JAX reference for verification
# ---------------------------------------------------------------------------

def _reference_forward(x, layer_params, fc_w, fc_b, *, stddev, noise=None,
                       training=True):
    if training:
        x = x + noise * stddev
    B, T, _ = x.shape
    num_layers = len(layer_params)
    H = layer_params[0][0].shape[0]
    h = [jnp.zeros((B, H), jnp.float32) for _ in range(num_layers)]
    for t in range(T):
        inp = x[:, t, :]
        for l, (w_ih, w_hh, b_ih, b_hh) in enumerate(layer_params):
            h[l] = jnp.tanh(inp @ w_ih.T + b_ih + h[l] @ w_hh.T + b_hh)
            inp = h[l]
    return h[-1] @ fc_w.T + fc_b


if __name__ == "__main__":
    B, T, I, H, L, C = 2, 16, 16, 32, 2, 4
    stddev = 0.1

    key = jax.random.PRNGKey(0)
    keys = jax.random.split(key, 2 + 4 * L + 2)
    kit = iter(keys)

    x = jax.random.normal(next(kit), (B, T, I), dtype=jnp.float32)
    noise = jax.random.normal(next(kit), (B, T, I), dtype=jnp.float32)

    bound = 1.0 / math.sqrt(H)

    def u(k, shape):
        return jax.random.uniform(k, shape, jnp.float32,
                                  minval=-bound, maxval=bound)

    layer_params = []
    for l in range(L):
        in_dim = I if l == 0 else H
        layer_params.append((u(next(kit), (H, in_dim)),   # weight_ih_l
                             u(next(kit), (H, H)),        # weight_hh_l
                             u(next(kit), (H,)),          # bias_ih_l
                             u(next(kit), (H,))))         # bias_hh_l
    fc_w = u(next(kit), (C, H))
    fc_b = u(next(kit), (C,))

    ref_train = _reference_forward(x, layer_params, fc_w, fc_b,
                                   stddev=stddev, noise=noise, training=True)
    ref_eval = _reference_forward(x, layer_params, fc_w, fc_b,
                                  stddev=stddev, training=False)

    # f32 matmuls + explicit time_block=8 (exercises the hidden-state carry
    # across two time-grid steps) -> tight tolerance vs. the JAX reference.
    out_f32 = jax.block_until_ready(
        rnn_forward(x, layer_params, fc_w, fc_b, stddev=stddev, noise=noise,
                    training=True, matmul_dtype=jnp.float32, time_block=8))
    out_f32_eval = jax.block_until_ready(
        rnn_forward(x, layer_params, fc_w, fc_b, stddev=stddev,
                    training=False, matmul_dtype=jnp.float32, time_block=8))

    # Default perf config: bf16 MXU operands, auto block sizes.
    out_bf16 = jax.block_until_ready(
        rnn_forward(x, layer_params, fc_w, fc_b, stddev=stddev, noise=noise,
                    training=True))
    out_bf16_eval = jax.block_until_ready(
        rnn_forward(x, layer_params, fc_w, fc_b, stddev=stddev,
                    training=False))

    assert out_f32.shape == (B, C) and out_f32.dtype == x.dtype
    assert bool(jnp.allclose(out_f32, ref_train, atol=5e-3, rtol=5e-3))
    assert bool(jnp.allclose(out_f32_eval, ref_eval, atol=5e-3, rtol=5e-3))
    assert bool(jnp.allclose(out_bf16, ref_train, atol=5e-2, rtol=5e-2))
    assert bool(jnp.allclose(out_bf16_eval, ref_eval, atol=5e-2, rtol=5e-2))

    print("KERNEL_OK")
</pallas_src>

<mosaic_0001>
module attributes {stable_mosaic.version = 11 : i64} {
  func.func @_rnn_fc_kernel(%arg0: i32, %arg1: i32, %arg2: memref<2x8x16xf32, #tpu.memory_space<vmem>>, %arg3: memref<2x8x16xf32, #tpu.memory_space<vmem>>, %arg4: memref<16x128xf32, #tpu.memory_space<vmem>>, %arg5: memref<128x128xf32, #tpu.memory_space<vmem>>, %arg6: memref<1x128xf32, #tpu.memory_space<vmem>>, %arg7: memref<128x128xf32, #tpu.memory_space<vmem>>, %arg8: memref<128x128xf32, #tpu.memory_space<vmem>>, %arg9: memref<1x128xf32, #tpu.memory_space<vmem>>, %arg10: memref<128x4xf32, #tpu.memory_space<vmem>>, %arg11: memref<1x4xf32, #tpu.memory_space<vmem>>, %arg12: memref<2x4xf32, #tpu.memory_space<vmem>>, %arg13: memref<2x2x128xf32, #tpu.memory_space<vmem>>, %arg14: memref<8x2x128xf32, #tpu.memory_space<vmem>>, %arg15: memref<8x2x128xf32, #tpu.memory_space<vmem>>) attributes {dimension_semantics = [#tpu.dimension_semantics<parallel>, #tpu.dimension_semantics<arbitrary>], iteration_bounds = array<i64: 1, 2>, scalar_prefetch = 0 : i64, scratch_operands = 3 : i64, tpu.core_type = #tpu.core_type<tc>, window_params = [{transform_indices = @transform_0, window_bounds = array<i64: 2, 8, 16>}, {transform_indices = @transform_1, window_bounds = array<i64: 2, 8, 16>}, {pipeline_mode = #tpu.pipeline_mode<synchronous>, transform_indices = @transform_2, window_bounds = array<i64: 16, 128>}, {pipeline_mode = #tpu.pipeline_mode<synchronous>, transform_indices = @transform_3, window_bounds = array<i64: 128, 128>}, {pipeline_mode = #tpu.pipeline_mode<synchronous>, transform_indices = @transform_4, window_bounds = array<i64: 1, 128>}, {pipeline_mode = #tpu.pipeline_mode<synchronous>, transform_indices = @transform_5, window_bounds = array<i64: 128, 128>}, {pipeline_mode = #tpu.pipeline_mode<synchronous>, transform_indices = @transform_6, window_bounds = array<i64: 128, 128>}, {pipeline_mode = #tpu.pipeline_mode<synchronous>, transform_indices = @transform_7, window_bounds = array<i64: 1, 128>}, {pipeline_mode = #tpu.pipeline_mode<synchronous>, transform_indices = @transform_8, window_bounds = array<i64: 128, 4>}, {pipeline_mode = #tpu.pipeline_mode<synchronous>, transform_indices = @transform_9, window_bounds = array<i64: 1, 4>}, {transform_indices = @transform_10, window_bounds = array<i64: 2, 4>}]} {
    %c0_i32 = arith.constant 0 : i32
    %0 = arith.cmpi eq, %arg1, %c0_i32 : i32
    %1 = arith.extui %0 : i1 to i32
    %c0_i32_0 = arith.constant 0 : i32
    %2 = arith.cmpi ne, %1, %c0_i32_0 : i32
    scf.if %2 {
      %cst_116 = arith.constant 0.000000e+00 : f32
      %169 = vector.broadcast %cst_116 : f32 to vector<2x2x128xf32>
      %c0_117 = arith.constant 0 : index
      %c0_118 = arith.constant 0 : index
      %c0_119 = arith.constant 0 : index
      %170 = vector.load %arg13[%c0_117, %c0_118, %c0_119] : memref<2x2x128xf32, #tpu.memory_space<vmem>>, vector<2x2x128xf32>
      tpu.vector_store %arg13[%c0_117, %c0_118, %c0_119], %169 {strides = array<i32>} : memref<2x2x128xf32, #tpu.memory_space<vmem>>, vector<2x2x128xf32>,
    } else {
    }
    %c0 = arith.constant 0 : index
    %c0_1 = arith.constant 0 : index
    %c0_2 = arith.constant 0 : index
    %3 = vector.load %arg2[%c0, %c0_1, %c0_2] : memref<2x8x16xf32, #tpu.memory_space<vmem>>, vector<2x8x16xf32>
    %c0_3 = arith.constant 0 : index
    %c0_4 = arith.constant 0 : index
    %c0_5 = arith.constant 0 : index
    %4 = vector.load %arg3[%c0_3, %c0_4, %c0_5] : memref<2x8x16xf32, #tpu.memory_space<vmem>>, vector<2x8x16xf32>
    %cst = arith.constant 1.000000e-01 : f32
    %5 = vector.broadcast %cst : f32 to vector<2x8x16xf32>
    %6 = arith.mulf %4, %5 : vector<2x8x16xf32>
    %7 = arith.addf %3, %6 : vector<2x8x16xf32>
    %8 = vector.shape_cast %7 : vector<2x8x16xf32> to vector<16x16xf32>
    %c0_6 = arith.constant 0 : index
    %c0_7 = arith.constant 0 : index
    %9 = vector.load %arg4[%c0_6, %c0_7] : memref<16x128xf32, #tpu.memory_space<vmem>>, vector<16x128xf32>
    %c0_8 = arith.constant 0 : index
    %c0_9 = arith.constant 0 : index
    %10 = vector.load %arg5[%c0_8, %c0_9] : memref<128x128xf32, #tpu.memory_space<vmem>>, vector<128x128xf32>
    %c0_10 = arith.constant 0 : index
    %c0_11 = arith.constant 0 : index
    %11 = vector.load %arg6[%c0_10, %c0_11] : memref<1x128xf32, #tpu.memory_space<vmem>>, vector<1x128xf32>
    %cst_12 = arith.constant dense<0.000000e+00> : vector<16x128xf32>
    %12 = tpu.matmul %8, %9, %cst_12 {dimension_numbers = #tpu.dot_dimension_numbers<[1], [0], [0], [1], [0, 0, 1, 1], [], []>} : vector<16x16xf32>, vector<16x128xf32>, vector<16x128xf32> -> vector<16x128xf32>
    %13 = vector.broadcast %11 : vector<1x128xf32> to vector<16x128xf32>
    %14 = arith.addf %12, %13 : vector<16x128xf32>
    %15 = vector.shape_cast %14 : vector<16x128xf32> to vector<2x8x128xf32>
    %16 = tpu.transpose %15, [1, 0, 2] : vector<2x8x128xf32> -> vector<8x2x128xf32>
    %c0_13 = arith.constant 0 : index
    %c0_14 = arith.constant 0 : index
    %c0_15 = arith.constant 0 : index
    %17 = vector.load %arg14[%c0_13, %c0_14, %c0_15] : memref<8x2x128xf32, #tpu.memory_space<vmem>>, vector<8x2x128xf32>
    tpu.vector_store %arg14[%c0_13, %c0_14, %c0_15], %16 {strides = array<i32>} : memref<8x2x128xf32, #tpu.memory_space<vmem>>, vector<8x2x128xf32>,
    %c0_16 = arith.constant 0 : index
    %c0_17 = arith.constant 0 : index
    %c0_18 = arith.constant 0 : index
    %18 = vector.load %arg13[%c0_16, %c0_17, %c0_18] : memref<2x2x128xf32, #tpu.memory_space<vmem>>, vector<1x2x128xf32>
    %19 = vector.shape_cast %18 : vector<1x2x128xf32> to vector<2x128xf32>
    %c0_i32_19 = arith.constant 0 : i32
    %20 = arith.index_cast %c0_i32_19 : i32 to index
    %c0_20 = arith.constant 0 : index
    %c0_21 = arith.constant 0 : index
    %21 = vector.load %arg14[%20, %c0_20, %c0_21] : memref<8x2x128xf32, #tpu.memory_space<vmem>>, vector<1x2x128xf32>
    %22 = vector.shape_cast %21 : vector<1x2x128xf32> to vector<2x128xf32>
    %cst_22 = arith.constant dense<0.000000e+00> : vector<2x128xf32>
    %23 = tpu.matmul %19, %10, %cst_22 {dimension_numbers = #tpu.dot_dimension_numbers<[1], [0], [0], [1], [0, 0, 1, 1], [], []>} : vector<2x128xf32>, vector<128x128xf32>, vector<2x128xf32> -> vector<2x128xf32>
    %24 = arith.addf %22, %23 : vector<2x128xf32>
    %25 = math.tanh %24 : vector<2x128xf32>
    %26 = arith.index_cast %c0_i32_19 : i32 to index
    %c0_23 = arith.constant 0 : index
    %c0_24 = arith.constant 0 : index
    %27 = vector.load %arg15[%26, %c0_23, %c0_24] : memref<8x2x128xf32, #tpu.memory_space<vmem>>, vector<1x2x128xf32>
    %28 = vector.shape_cast %27 : vector<1x2x128xf32> to vector<2x128xf32>
    %29 = vector.shape_cast %25 : vector<2x128xf32> to vector<1x2x128xf32>
    tpu.vector_store %arg15[%26, %c0_23, %c0_24], %29 {strides = array<i32>} : memref<8x2x128xf32, #tpu.memory_space<vmem>>, vector<1x2x128xf32>,
    %c1_i32 = arith.constant 1 : i32
    %30 = arith.index_cast %c1_i32 : i32 to index
    %c0_25 = arith.constant 0 : index
    %c0_26 = arith.constant 0 : index
    %31 = vector.load %arg14[%30, %c0_25, %c0_26] : memref<8x2x128xf32, #tpu.memory_space<vmem>>, vector<1x2x128xf32>
    %32 = vector.shape_cast %31 : vector<1x2x128xf32> to vector<2x128xf32>
    %cst_27 = arith.constant dense<0.000000e+00> : vector<2x128xf32>
    %33 = tpu.matmul %25, %10, %cst_27 {dimension_numbers = #tpu.dot_dimension_numbers<[1], [0], [0], [1], [0, 0, 1, 1], [], []>} : vector<2x128xf32>, vector<128x128xf32>, vector<2x128xf32> -> vector<2x128xf32>
    %34 = arith.addf %32, %33 : vector<2x128xf32>
    %35 = math.tanh %34 : vector<2x128xf32>
    %36 = arith.index_cast %c1_i32 : i32 to index
    %c0_28 = arith.constant 0 : index
    %c0_29 = arith.constant 0 : index
    %37 = vector.load %arg15[%36, %c0_28, %c0_29] : memref<8x2x128xf32, #tpu.memory_space<vmem>>, vector<1x2x128xf32>
    %38 = vector.shape_cast %37 : vector<1x2x128xf32> to vector<2x128xf32>
    %39 = vector.shape_cast %35 : vector<2x128xf32> to vector<1x2x128xf32>
    tpu.vector_store %arg15[%36, %c0_28, %c0_29], %39 {strides = array<i32>} : memref<8x2x128xf32, #tpu.memory_space<vmem>>, vector<1x2x128xf32>,
    %c2_i32 = arith.constant 2 : i32
    %40 = arith.index_cast %c2_i32 : i32 to index
    %c0_30 = arith.constant 0 : index
    %c0_31 = arith.constant 0 : index
    %41 = vector.load %arg14[%40, %c0_30, %c0_31] : memref<8x2x128xf32, #tpu.memory_space<vmem>>, vector<1x2x128xf32>
    %42 = vector.shape_cast %41 : vector<1x2x128xf32> to vector<2x128xf32>
    %cst_32 = arith.constant dense<0.000000e+00> : vector<2x128xf32>
    %43 = tpu.matmul %35, %10, %cst_32 {dimension_numbers = #tpu.dot_dimension_numbers<[1], [0], [0], [1], [0, 0, 1, 1], [], []>} : vector<2x128xf32>, vector<128x128xf32>, vector<2x128xf32> -> vector<2x128xf32>
    %44 = arith.addf %42, %43 : vector<2x128xf32>
    %45 = math.tanh %44 : vector<2x128xf32>
    %46 = arith.index_cast %c2_i32 : i32 to index
    %c0_33 = arith.constant 0 : index
    %c0_34 = arith.constant 0 : index
    %47 = vector.load %arg15[%46, %c0_33, %c0_34] : memref<8x2x128xf32, #tpu.memory_space<vmem>>, vector<1x2x128xf32>
    %48 = vector.shape_cast %47 : vector<1x2x128xf32> to vector<2x128xf32>
    %49 = vector.shape_cast %45 : vector<2x128xf32> to vector<1x2x128xf32>
    tpu.vector_store %arg15[%46, %c0_33, %c0_34], %49 {strides = array<i32>} : memref<8x2x128xf32, #tpu.memory_space<vmem>>, vector<1x2x128xf32>,
    %c3_i32 = arith.constant 3 : i32
    %50 = arith.index_cast %c3_i32 : i32 to index
    %c0_35 = arith.constant 0 : index
    %c0_36 = arith.constant 0 : index
    %51 = vector.load %arg14[%50, %c0_35, %c0_36] : memref<8x2x128xf32, #tpu.memory_space<vmem>>, vector<1x2x128xf32>
    %52 = vector.shape_cast %51 : vector<1x2x128xf32> to vector<2x128xf32>
    %cst_37 = arith.constant dense<0.000000e+00> : vector<2x128xf32>
    %53 = tpu.matmul %45, %10, %cst_37 {dimension_numbers = #tpu.dot_dimension_numbers<[1], [0], [0], [1], [0, 0, 1, 1], [], []>} : vector<2x128xf32>, vector<128x128xf32>, vector<2x128xf32> -> vector<2x128xf32>
    %54 = arith.addf %52, %53 : vector<2x128xf32>
    %55 = math.tanh %54 : vector<2x128xf32>
    %56 = arith.index_cast %c3_i32 : i32 to index
    %c0_38 = arith.constant 0 : index
    %c0_39 = arith.constant 0 : index
    %57 = vector.load %arg15[%56, %c0_38, %c0_39] : memref<8x2x128xf32, #tpu.memory_space<vmem>>, vector<1x2x128xf32>
    %58 = vector.shape_cast %57 : vector<1x2x128xf32> to vector<2x128xf32>
    %59 = vector.shape_cast %55 : vector<2x128xf32> to vector<1x2x128xf32>
    tpu.vector_store %arg15[%56, %c0_38, %c0_39], %59 {strides = array<i32>} : memref<8x2x128xf32, #tpu.memory_space<vmem>>, vector<1x2x128xf32>,
    %c4_i32 = arith.constant 4 : i32
    %60 = arith.index_cast %c4_i32 : i32 to index
    %c0_40 = arith.constant 0 : index
    %c0_41 = arith.constant 0 : index
    %61 = vector.load %arg14[%60, %c0_40, %c0_41] : memref<8x2x128xf32, #tpu.memory_space<vmem>>, vector<1x2x128xf32>
    %62 = vector.shape_cast %61 : vector<1x2x128xf32> to vector<2x128xf32>
    %cst_42 = arith.constant dense<0.000000e+00> : vector<2x128xf32>
    %63 = tpu.matmul %55, %10, %cst_42 {dimension_numbers = #tpu.dot_dimension_numbers<[1], [0], [0], [1], [0, 0, 1, 1], [], []>} : vector<2x128xf32>, vector<128x128xf32>, vector<2x128xf32> -> vector<2x128xf32>
    %64 = arith.addf %62, %63 : vector<2x128xf32>
    %65 = math.tanh %64 : vector<2x128xf32>
    %66 = arith.index_cast %c4_i32 : i32 to index
    %c0_43 = arith.constant 0 : index
    %c0_44 = arith.constant 0 : index
    %67 = vector.load %arg15[%66, %c0_43, %c0_44] : memref<8x2x128xf32, #tpu.memory_space<vmem>>, vector<1x2x128xf32>
    %68 = vector.shape_cast %67 : vector<1x2x128xf32> to vector<2x128xf32>
    %69 = vector.shape_cast %65 : vector<2x128xf32> to vector<1x2x128xf32>
    tpu.vector_store %arg15[%66, %c0_43, %c0_44], %69 {strides = array<i32>} : memref<8x2x128xf32, #tpu.memory_space<vmem>>, vector<1x2x128xf32>,
    %c5_i32 = arith.constant 5 : i32
    %70 = arith.index_cast %c5_i32 : i32 to index
    %c0_45 = arith.constant 0 : index
    %c0_46 = arith.constant 0 : index
    %71 = vector.load %arg14[%70, %c0_45, %c0_46] : memref<8x2x128xf32, #tpu.memory_space<vmem>>, vector<1x2x128xf32>
    %72 = vector.shape_cast %71 : vector<1x2x128xf32> to vector<2x128xf32>
    %cst_47 = arith.constant dense<0.000000e+00> : vector<2x128xf32>
    %73 = tpu.matmul %65, %10, %cst_47 {dimension_numbers = #tpu.dot_dimension_numbers<[1], [0], [0], [1], [0, 0, 1, 1], [], []>} : vector<2x128xf32>, vector<128x128xf32>, vector<2x128xf32> -> vector<2x128xf32>
    %74 = arith.addf %72, %73 : vector<2x128xf32>
    %75 = math.tanh %74 : vector<2x128xf32>
    %76 = arith.index_cast %c5_i32 : i32 to index
    %c0_48 = arith.constant 0 : index
    %c0_49 = arith.constant 0 : index
    %77 = vector.load %arg15[%76, %c0_48, %c0_49] : memref<8x2x128xf32, #tpu.memory_space<vmem>>, vector<1x2x128xf32>
    %78 = vector.shape_cast %77 : vector<1x2x128xf32> to vector<2x128xf32>
    %79 = vector.shape_cast %75 : vector<2x128xf32> to vector<1x2x128xf32>
    tpu.vector_store %arg15[%76, %c0_48, %c0_49], %79 {strides = array<i32>} : memref<8x2x128xf32, #tpu.memory_space<vmem>>, vector<1x2x128xf32>,
    %c6_i32 = arith.constant 6 : i32
    %80 = arith.index_cast %c6_i32 : i32 to index
    %c0_50 = arith.constant 0 : index
    %c0_51 = arith.constant 0 : index
    %81 = vector.load %arg14[%80, %c0_50, %c0_51] : memref<8x2x128xf32, #tpu.memory_space<vmem>>, vector<1x2x128xf32>
    %82 = vector.shape_cast %81 : vector<1x2x128xf32> to vector<2x128xf32>
    %cst_52 = arith.constant dense<0.000000e+00> : vector<2x128xf32>
    %83 = tpu.matmul %75, %10, %cst_52 {dimension_numbers = #tpu.dot_dimension_numbers<[1], [0], [0], [1], [0, 0, 1, 1], [], []>} : vector<2x128xf32>, vector<128x128xf32>, vector<2x128xf32> -> vector<2x128xf32>
    %84 = arith.addf %82, %83 : vector<2x128xf32>
    %85 = math.tanh %84 : vector<2x128xf32>
    %86 = arith.index_cast %c6_i32 : i32 to index
    %c0_53 = arith.constant 0 : index
    %c0_54 = arith.constant 0 : index
    %87 = vector.load %arg15[%86, %c0_53, %c0_54] : memref<8x2x128xf32, #tpu.memory_space<vmem>>, vector<1x2x128xf32>
    %88 = vector.shape_cast %87 : vector<1x2x128xf32> to vector<2x128xf32>
    %89 = vector.shape_cast %85 : vector<2x128xf32> to vector<1x2x128xf32>
    tpu.vector_store %arg15[%86, %c0_53, %c0_54], %89 {strides = array<i32>} : memref<8x2x128xf32, #tpu.memory_space<vmem>>, vector<1x2x128xf32>,
    %c7_i32 = arith.constant 7 : i32
    %90 = arith.index_cast %c7_i32 : i32 to index
    %c0_55 = arith.constant 0 : index
    %c0_56 = arith.constant 0 : index
    %91 = vector.load %arg14[%90, %c0_55, %c0_56] : memref<8x2x128xf32, #tpu.memory_space<vmem>>, vector<1x2x128xf32>
    %92 = vector.shape_cast %91 : vector<1x2x128xf32> to vector<2x128xf32>
    %cst_57 = arith.constant dense<0.000000e+00> : vector<2x128xf32>
    %93 = tpu.matmul %85, %10, %cst_57 {dimension_numbers = #tpu.dot_dimension_numbers<[1], [0], [0], [1], [0, 0, 1, 1], [], []>} : vector<2x128xf32>, vector<128x128xf32>, vector<2x128xf32> -> vector<2x128xf32>
    %94 = arith.addf %92, %93 : vector<2x128xf32>
    %95 = math.tanh %94 : vector<2x128xf32>
    %96 = arith.index_cast %c7_i32 : i32 to index
    %c0_58 = arith.constant 0 : index
    %c0_59 = arith.constant 0 : index
    %97 = vector.load %arg15[%96, %c0_58, %c0_59] : memref<8x2x128xf32, #tpu.memory_space<vmem>>, vector<1x2x128xf32>
    %98 = vector.shape_cast %97 : vector<1x2x128xf32> to vector<2x128xf32>
    %99 = vector.shape_cast %95 : vector<2x128xf32> to vector<1x2x128xf32>
    tpu.vector_store %arg15[%96, %c0_58, %c0_59], %99 {strides = array<i32>} : memref<8x2x128xf32, #tpu.memory_space<vmem>>, vector<1x2x128xf32>,
    %c8_i32 = arith.constant 8 : i32
    %c0_60 = arith.constant 0 : index
    %c0_61 = arith.constant 0 : index
    %c0_62 = arith.constant 0 : index
    %100 = vector.load %arg13[%c0_60, %c0_61, %c0_62] : memref<2x2x128xf32, #tpu.memory_space<vmem>>, vector<1x2x128xf32>
    %101 = vector.shape_cast %100 : vector<1x2x128xf32> to vector<2x128xf32>
    %102 = vector.shape_cast %95 : vector<2x128xf32> to vector<1x2x128xf32>
    tpu.vector_store %arg13[%c0_60, %c0_61, %c0_62], %102 {strides = array<i32>} : memref<2x2x128xf32, #tpu.memory_space<vmem>>, vector<1x2x128xf32>,
    %c0_63 = arith.constant 0 : index
    %c0_64 = arith.constant 0 : index
    %c0_65 = arith.constant 0 : index
    %103 = vector.load %arg15[%c0_63, %c0_64, %c0_65] : memref<8x2x128xf32, #tpu.memory_space<vmem>>, vector<8x2x128xf32>
    %104 = vector.shape_cast %103 : vector<8x2x128xf32> to vector<16x128xf32>
    %c0_66 = arith.constant 0 : index
    %c0_67 = arith.constant 0 : index
    %105 = vector.load %arg7[%c0_66, %c0_67] : memref<128x128xf32, #tpu.memory_space<vmem>>, vector<128x128xf32>
    %c0_68 = arith.constant 0 : index
    %c0_69 = arith.constant 0 : index
    %106 = vector.load %arg8[%c0_68, %c0_69] : memref<128x128xf32, #tpu.memory_space<vmem>>, vector<128x128xf32>
    %c0_70 = arith.constant 0 : index
    %c0_71 = arith.constant 0 : index
    %107 = vector.load %arg9[%c0_70, %c0_71] : memref<1x128xf32, #tpu.memory_space<vmem>>, vector<1x128xf32>
    %cst_72 = arith.constant dense<0.000000e+00> : vector<16x128xf32>
    %108 = tpu.matmul %104, %105, %cst_72 {dimension_numbers = #tpu.dot_dimension_numbers<[1], [0], [0], [1], [0, 0, 1, 1], [], []>} : vector<16x128xf32>, vector<128x128xf32>, vector<16x128xf32> -> vector<16x128xf32>
    %109 = vector.broadcast %107 : vector<1x128xf32> to vector<16x128xf32>
    %110 = arith.addf %108, %109 : vector<16x128xf32>
    %111 = vector.shape_cast %110 : vector<16x128xf32> to vector<8x2x128xf32>
    %c0_73 = arith.constant 0 : index
    %c0_74 = arith.constant 0 : index
    %c0_75 = arith.constant 0 : index
    %112 = vector.load %arg14[%c0_73, %c0_74, %c0_75] : memref<8x2x128xf32, #tpu.memory_space<vmem>>, vector<8x2x128xf32>
    tpu.vector_store %arg14[%c0_73, %c0_74, %c0_75], %111 {strides = array<i32>} : memref<8x2x128xf32, #tpu.memory_space<vmem>>, vector<8x2x128xf32>,
    %c1 = arith.constant 1 : index
    %c0_76 = arith.constant 0 : index
    %c0_77 = arith.constant 0 : index
    %113 = vector.load %arg13[%c1, %c0_76, %c0_77] : memref<2x2x128xf32, #tpu.memory_space<vmem>>, vector<1x2x128xf32>
    %114 = vector.shape_cast %113 : vector<1x2x128xf32> to vector<2x128xf32>
    %c0_i32_78 = arith.constant 0 : i32
    %115 = arith.index_cast %c0_i32_78 : i32 to index
    %c0_79 = arith.constant 0 : index
    %c0_80 = arith.constant 0 : index
    %116 = vector.load %arg14[%115, %c0_79, %c0_80] : memref<8x2x128xf32, #tpu.memory_space<vmem>>, vector<1x2x128xf32>
    %117 = vector.shape_cast %116 : vector<1x2x128xf32> to vector<2x128xf32>
    %cst_81 = arith.constant dense<0.000000e+00> : vector<2x128xf32>
    %118 = tpu.matmul %114, %106, %cst_81 {dimension_numbers = #tpu.dot_dimension_numbers<[1], [0], [0], [1], [0, 0, 1, 1], [], []>} : vector<2x128xf32>, vector<128x128xf32>, vector<2x128xf32> -> vector<2x128xf32>
    %119 = arith.addf %117, %118 : vector<2x128xf32>
    %120 = math.tanh %119 : vector<2x128xf32>
    %c1_i32_82 = arith.constant 1 : i32
    %121 = arith.index_cast %c1_i32_82 : i32 to index
    %c0_83 = arith.constant 0 : index
    %c0_84 = arith.constant 0 : index
    %122 = vector.load %arg14[%121, %c0_83, %c0_84] : memref<8x2x128xf32, #tpu.memory_space<vmem>>, vector<1x2x128xf32>
    %123 = vector.shape_cast %122 : vector<1x2x128xf32> to vector<2x128xf32>
    %cst_85 = arith.constant dense<0.000000e+00> : vector<2x128xf32>
    %124 = tpu.matmul %120, %106, %cst_85 {dimension_numbers = #tpu.dot_dimension_numbers<[1], [0], [0], [1], [0, 0, 1, 1], [], []>} : vector<2x128xf32>, vector<128x128xf32>, vector<2x128xf32> -> vector<2x128xf32>
    %125 = arith.addf %123, %124 : vector<2x128xf32>
    %126 = math.tanh %125 : vector<2x128xf32>
    %c2_i32_86 = arith.constant 2 : i32
    %127 = arith.index_cast %c2_i32_86 : i32 to index
    %c0_87 = arith.constant 0 : index
    %c0_88 = arith.constant 0 : index
    %128 = vector.load %arg14[%127, %c0_87, %c0_88] : memref<8x2x128xf32, #tpu.memory_space<vmem>>, vector<1x2x128xf32>
    %129 = vector.shape_cast %128 : vector<1x2x128xf32> to vector<2x128xf32>
    %cst_89 = arith.constant dense<0.000000e+00> : vector<2x128xf32>
    %130 = tpu.matmul %126, %106, %cst_89 {dimension_numbers = #tpu.dot_dimension_numbers<[1], [0], [0], [1], [0, 0, 1, 1], [], []>} : vector<2x128xf32>, vector<128x128xf32>, vector<2x128xf32> -> vector<2x128xf32>
    %131 = arith.addf %129, %130 : vector<2x128xf32>
    %132 = math.tanh %131 : vector<2x128xf32>
    %c3_i32_90 = arith.constant 3 : i32
    %133 = arith.index_cast %c3_i32_90 : i32 to index
    %c0_91 = arith.constant 0 : index
    %c0_92 = arith.constant 0 : index
    %134 = vector.load %arg14[%133, %c0_91, %c0_92] : memref<8x2x128xf32, #tpu.memory_space<vmem>>, vector<1x2x128xf32>
    %135 = vector.shape_cast %134 : vector<1x2x128xf32> to vector<2x128xf32>
    %cst_93 = arith.constant dense<0.000000e+00> : vector<2x128xf32>
    %136 = tpu.matmul %132, %106, %cst_93 {dimension_numbers = #tpu.dot_dimension_numbers<[1], [0], [0], [1], [0, 0, 1, 1], [], []>} : vector<2x128xf32>, vector<128x128xf32>, vector<2x128xf32> -> vector<2x128xf32>
    %137 = arith.addf %135, %136 : vector<2x128xf32>
    %138 = math.tanh %137 : vector<2x128xf32>
    %c4_i32_94 = arith.constant 4 : i32
    %139 = arith.index_cast %c4_i32_94 : i32 to index
    %c0_95 = arith.constant 0 : index
    %c0_96 = arith.constant 0 : index
    %140 = vector.load %arg14[%139, %c0_95, %c0_96] : memref<8x2x128xf32, #tpu.memory_space<vmem>>, vector<1x2x128xf32>
    %141 = vector.shape_cast %140 : vector<1x2x128xf32> to vector<2x128xf32>
    %cst_97 = arith.constant dense<0.000000e+00> : vector<2x128xf32>
    %142 = tpu.matmul %138, %106, %cst_97 {dimension_numbers = #tpu.dot_dimension_numbers<[1], [0], [0], [1], [0, 0, 1, 1], [], []>} : vector<2x128xf32>, vector<128x128xf32>, vector<2x128xf32> -> vector<2x128xf32>
    %143 = arith.addf %141, %142 : vector<2x128xf32>
    %144 = math.tanh %143 : vector<2x128xf32>
    %c5_i32_98 = arith.constant 5 : i32
    %145 = arith.index_cast %c5_i32_98 : i32 to index
    %c0_99 = arith.constant 0 : index
    %c0_100 = arith.constant 0 : index
    %146 = vector.load %arg14[%145, %c0_99, %c0_100] : memref<8x2x128xf32, #tpu.memory_space<vmem>>, vector<1x2x128xf32>
    %147 = vector.shape_cast %146 : vector<1x2x128xf32> to vector<2x128xf32>
    %cst_101 = arith.constant dense<0.000000e+00> : vector<2x128xf32>
    %148 = tpu.matmul %144, %106, %cst_101 {dimension_numbers = #tpu.dot_dimension_numbers<[1], [0], [0], [1], [0, 0, 1, 1], [], []>} : vector<2x128xf32>, vector<128x128xf32>, vector<2x128xf32> -> vector<2x128xf32>
    %149 = arith.addf %147, %148 : vector<2x128xf32>
    %150 = math.tanh %149 : vector<2x128xf32>
    %c6_i32_102 = arith.constant 6 : i32
    %151 = arith.index_cast %c6_i32_102 : i32 to index
    %c0_103 = arith.constant 0 : index
    %c0_104 = arith.constant 0 : index
    %152 = vector.load %arg14[%151, %c0_103, %c0_104] : memref<8x2x128xf32, #tpu.memory_space<vmem>>, vector<1x2x128xf32>
    %153 = vector.shape_cast %152 : vector<1x2x128xf32> to vector<2x128xf32>
    %cst_105 = arith.constant dense<0.000000e+00> : vector<2x128xf32>
    %154 = tpu.matmul %150, %106, %cst_105 {dimension_numbers = #tpu.dot_dimension_numbers<[1], [0], [0], [1], [0, 0, 1, 1], [], []>} : vector<2x128xf32>, vector<128x128xf32>, vector<2x128xf32> -> vector<2x128xf32>
    %155 = arith.addf %153, %154 : vector<2x128xf32>
    %156 = math.tanh %155 : vector<2x128xf32>
    %c7_i32_106 = arith.constant 7 : i32
    %157 = arith.index_cast %c7_i32_106 : i32 to index
    %c0_107 = arith.constant 0 : index
    %c0_108 = arith.constant 0 : index
    %158 = vector.load %arg14[%157, %c0_107, %c0_108] : memref<8x2x128xf32, #tpu.memory_space<vmem>>, vector<1x2x128xf32>
    %159 = vector.shape_cast %158 : vector<1x2x128xf32> to vector<2x128xf32>
    %cst_109 = arith.constant dense<0.000000e+00> : vector<2x128xf32>
    %160 = tpu.matmul %156, %106, %cst_109 {dimension_numbers = #tpu.dot_dimension_numbers<[1], [0], [0], [1], [0, 0, 1, 1], [], []>} : vector<2x128xf32>, vector<128x128xf32>, vector<2x128xf32> -> vector<2x128xf32>
    %161 = arith.addf %159, %160 : vector<2x128xf32>
    %162 = math.tanh %161 : vector<2x128xf32>
    %c8_i32_110 = arith.constant 8 : i32
    %c1_111 = arith.constant 1 : index
    %c0_112 = arith.constant 0 : index
    %c0_113 = arith.constant 0 : index
    %163 = vector.load %arg13[%c1_111, %c0_112, %c0_113] : memref<2x2x128xf32, #tpu.memory_space<vmem>>, vector<1x2x128xf32>
    %164 = vector.shape_cast %163 : vector<1x2x128xf32> to vector<2x128xf32>
    %165 = vector.shape_cast %162 : vector<2x128xf32> to vector<1x2x128xf32>
    tpu.vector_store %arg13[%c1_111, %c0_112, %c0_113], %165 {strides = array<i32>} : memref<2x2x128xf32, #tpu.memory_space<vmem>>, vector<1x2x128xf32>,
    %c1_i32_114 = arith.constant 1 : i32
    %166 = arith.cmpi eq, %arg1, %c1_i32_114 : i32
    %167 = arith.extui %166 : i1 to i32
    %c0_i32_115 = arith.constant 0 : i32
    %168 = arith.cmpi ne, %167, %c0_i32_115 : i32
    scf.if %168 {
      %c0_116 = arith.constant 0 : index
      %c0_117 = arith.constant 0 : index
      %169 = vector.load %arg10[%c0_116, %c0_117] : memref<128x4xf32, #tpu.memory_space<vmem>>, vector<128x4xf32>
      %cst_118 = arith.constant dense<0.000000e+00> : vector<2x4xf32>
      %170 = tpu.matmul %162, %169, %cst_118 {dimension_numbers = #tpu.dot_dimension_numbers<[1], [0], [0], [1], [0, 0, 1, 1], [], []>} : vector<2x128xf32>, vector<128x4xf32>, vector<2x4xf32> -> vector<2x4xf32>
      %c0_119 = arith.constant 0 : index
      %c0_120 = arith.constant 0 : index
      %171 = vector.load %arg11[%c0_119, %c0_120] : memref<1x4xf32, #tpu.memory_space<vmem>>, vector<1x4xf32>
      %172 = vector.broadcast %171 : vector<1x4xf32> to vector<2x4xf32>
      %173 = arith.addf %170, %172 : vector<2x4xf32>
      %c0_121 = arith.constant 0 : index
      %c0_122 = arith.constant 0 : index
      %174 = vector.load %arg12[%c0_121, %c0_122] : memref<2x4xf32, #tpu.memory_space<vmem>>, vector<2x4xf32>
      tpu.vector_store %arg12[%c0_121, %c0_122], %173 {strides = array<i32>} : memref<2x4xf32, #tpu.memory_space<vmem>>, vector<2x4xf32>,
    } else {
    }
    return
  }
  func.func @transform_0(%arg0: i32, %arg1: i32) -> (i32, i32, i32) {
    %c0_i32 = arith.constant 0 : i32
    %c0_i32_0 = arith.constant 0 : i32
    return %arg0, %arg1, %c0_i32 : i32, i32, i32
  }
  func.func @transform_1(%arg0: i32, %arg1: i32) -> (i32, i32, i32) {
    %c0_i32 = arith.constant 0 : i32
    %c0_i32_0 = arith.constant 0 : i32
    return %arg0, %arg1, %c0_i32 : i32, i32, i32
  }
  func.func @transform_2(%arg0: i32, %arg1: i32) -> (i32, i32) {
    %c0_i32 = arith.constant 0 : i32
    %c0_i32_0 = arith.constant 0 : i32
    %c0_i32_1 = arith.constant 0 : i32
    return %c0_i32, %c0_i32_0 : i32, i32
  }
  func.func @transform_3(%arg0: i32, %arg1: i32) -> (i32, i32) {
    %c0_i32 = arith.constant 0 : i32
    %c0_i32_0 = arith.constant 0 : i32
    %c0_i32_1 = arith.constant 0 : i32
    return %c0_i32, %c0_i32_0 : i32, i32
  }
  func.func @transform_4(%arg0: i32, %arg1: i32) -> (i32, i32) {
    %c0_i32 = arith.constant 0 : i32
    %c0_i32_0 = arith.constant 0 : i32
    %c0_i32_1 = arith.constant 0 : i32
    return %c0_i32, %c0_i32_0 : i32, i32
  }
  func.func @transform_5(%arg0: i32, %arg1: i32) -> (i32, i32) {
    %c0_i32 = arith.constant 0 : i32
    %c0_i32_0 = arith.constant 0 : i32
    %c0_i32_1 = arith.constant 0 : i32
    return %c0_i32, %c0_i32_0 : i32, i32
  }
  func.func @transform_6(%arg0: i32, %arg1: i32) -> (i32, i32) {
    %c0_i32 = arith.constant 0 : i32
    %c0_i32_0 = arith.constant 0 : i32
    %c0_i32_1 = arith.constant 0 : i32
    return %c0_i32, %c0_i32_0 : i32, i32
  }
  func.func @transform_7(%arg0: i32, %arg1: i32) -> (i32, i32) {
    %c0_i32 = arith.constant 0 : i32
    %c0_i32_0 = arith.constant 0 : i32
    %c0_i32_1 = arith.constant 0 : i32
    return %c0_i32, %c0_i32_0 : i32, i32
  }
  func.func @transform_8(%arg0: i32, %arg1: i32) -> (i32, i32) {
    %c0_i32 = arith.constant 0 : i32
    %c0_i32_0 = arith.constant 0 : i32
    %c0_i32_1 = arith.constant 0 : i32
    return %c0_i32, %c0_i32_0 : i32, i32
  }
  func.func @transform_9(%arg0: i32, %arg1: i32) -> (i32, i32) {
    %c0_i32 = arith.constant 0 : i32
    %c0_i32_0 = arith.constant 0 : i32
    %c0_i32_1 = arith.constant 0 : i32
    return %c0_i32, %c0_i32_0 : i32, i32
  }
  func.func @transform_10(%arg0: i32, %arg1: i32) -> (i32, i32) {
    %c0_i32 = arith.constant 0 : i32
    %c0_i32_0 = arith.constant 0 : i32
    return %arg0, %c0_i32 : i32, i32
  }
}

</mosaic_0001>

<llo_original>
// kernel: tpu_custom_call.1
$region0: #{tpu_custom_call.1}
  #allocation0 [shape = 'u32[]', space=smem, size = 0x4, offset = 0x4, fixed_abs, tag = 'smem constant byte address 0x4 - core index']
  #allocation1 [shape = 'u32[144,128]{1,0:T(1,128)}', space=vmem, size = 0x12000, scoped, tag = 'internal scratch']
  #allocation2 [shape = 'f32[2,2,128]{2,1,0:T(2,128)}', space=vmem, size = 0x800, scoped, tag = 'scratch operand']
  #allocation3 [shape = 'f32[8,2,128]{2,1,0:T(2,128)}', space=vmem, size = 0x2000, scoped, tag = 'scratch operand']
  #allocation4 [shape = 'f32[8,2,128]{2,1,0:T(2,128)}', space=vmem, size = 0x2000, scoped, tag = 'scratch operand']
  %s0 = inlined_call_operand.hbm [shape: f32[2,16,16], index: 0, kind: input, shape index: {}]
  %s1 = inlined_call_operand.hbm [shape: f32[2,16,16], index: 1, kind: input, shape index: {}]
  %s2 = inlined_call_operand.hbm [shape: f32[16,128], index: 2, kind: input, shape index: {}]
  %s3 = inlined_call_operand.vmem [shape: f32[128,128], index: 3, kind: input, shape index: {}]
  %s4 = inlined_call_operand.vmem [shape: f32[1,128], index: 4, kind: input, shape index: {}]
  %s5 = inlined_call_operand.hbm [shape: f32[128,128], index: 5, kind: input, shape index: {}]
  %s6 = inlined_call_operand.hbm [shape: f32[128,128], index: 6, kind: input, shape index: {}]
  %s7 = inlined_call_operand.vmem [shape: f32[1,128], index: 7, kind: input, shape index: {}]
  %s8 = inlined_call_operand.vmem [shape: f32[128,4], index: 8, kind: input, shape index: {}]
  %s9 = inlined_call_operand.vmem [shape: f32[1,4], index: 9, kind: input, shape index: {}]
  %s10 = inlined_call_operand.hbm [shape: f32[2,4], index: 10, kind: output, shape index: {}]
  %s11 = sld [smem:[#allocation0]]
  $region101: #{tpu_custom_call.1} parent=0
    _
  %s13 = ssub.s32 1, %s11
  %s14 = scalar_select 0, %s13, %s11
  $region1: #{tpu_custom_call.1} parent=0
    #allocation5 [shape = 'u8[16384]{0}', space=vmem, size = 0x4000, scoped, tag = 'input window, operand 0']
    #allocation6 [shape = 's32[2]{0}', space=sflag, size = 0x8, scoped, tag = 'scoped memory for tpu_custom_call.1']
    #allocation7 [shape = 's32[2]{0}', space=sflag, size = 0x8, scoped, tag = 'scoped memory for tpu_custom_call.1']
    #allocation8 [shape = 'u8[16384]{0}', space=vmem, size = 0x4000, scoped, tag = 'input window, operand 1']
    #allocation9 [shape = 's32[2]{0}', space=sflag, size = 0x8, scoped, tag = 'scoped memory for tpu_custom_call.1']
    #allocation10 [shape = 'u8[8192]{0}', space=vmem, size = 0x2000, scoped, tag = 'input window, operand 2, single buffered']
    #allocation11 [shape = 'u8[65536]{0}', space=vmem, size = 0x10000, scoped, tag = 'input window, operand 5, single buffered']
    #allocation12 [shape = 's32[1]{0}', space=sflag, size = 0x4, scoped, tag = 'scoped memory for tpu_custom_call.1']
    #allocation13 [shape = 'u8[65536]{0}', space=vmem, size = 0x10000, scoped, tag = 'input window, operand 6, single buffered']
    #allocation14 [shape = 'u8[1024]{0}', space=vmem, size = 0x400, scoped, tag = 'output window, operand 0, single buffered']
    %15 = vsyncpa [#allocation6], 0
    %s16 = scalar_lea.sflag [#allocation6], 1
    %17 = vsyncpa %s16, 0
    %18 = vsyncpa [#allocation9], 0
    %s19 = scalar_lea.sflag [#allocation9], 1
    %20 = vsyncpa %s19, 0
    %21 = vsyncpa [#allocation12], 0
    %22 = vsyncpa [#allocation7], 0
    loop: start=0, step=1, limit=4
    $region2: #{tpu_custom_call.1} parent=1 // loop_pre_header
      _
    $region3: #{tpu_custom_call.1} parent=1 // loop_header
      %s24 = sphi 0, %s28
      %p25 = scmp.ge.s32.totalorder %s24, 4
      %s31 = sphi 0, %s43
      %s32 = sphi 0, %s39
      %s33 = sphi 0, %s31
      %s34 = sphi 0, %s32
      %s35 = sphi 0, %s33
      %s36 = sphi 0, %s34
      %s48 = sphi 0, %s50
      %s51 = sphi 0, %s48
      %s52 = sphi 0, %s51
      %s68 = sphi 0, %s52
      %s76 = sphi 0, %s78
      %s79 = sphi 0, %s76
      %s80 = sphi 0, %s79
      %s96 = sphi 0, %s80
      %s100 = sphi 0, %s100
      %s102 = sphi 0, %s100
      %s103 = sphi 0, %s102
      %s117 = sphi 0, %s103
      %s121 = sphi 0, %s121
      %s123 = sphi 0, %s121
      %s124 = sphi 0, %s123
      %s138 = sphi 0, %s124
      %s142 = sphi 0, %s142
      %s144 = sphi 0, %s142
      %s145 = sphi 0, %s144
      %s159 = sphi 0, %s145
      %s163 = sphi 0, %s163
      %s165 = sphi 0, %s163
      %s166 = sphi 0, %s165
      %s180 = sphi 0, %s166
      %s184 = sphi 0, %s184
      %s186 = sphi 0, %s184
      %s187 = sphi 0, %s186
      %s201 = sphi 0, %s187
      %s205 = sphi 0, %s205
      %s207 = sphi 0, %s205
      %s208 = sphi 0, %s207
      %s222 = sphi 0, %s208
      %s226 = sphi 0, %s226
      %s228 = sphi 0, %s226
      %s229 = sphi 0, %s228
      %s243 = sphi 0, %s229
      %s247 = sphi 0, %s247
      %s249 = sphi 0, %s247
      %s250 = sphi 0, %s249
      %s264 = sphi 0, %s250
      %s270 = sphi 0, %s272
      %s273 = sphi 0, %s270
      %s274 = sphi 0, %s273
      %s290 = sphi 0, %s274
    $region4: #{tpu_custom_call.1} parent=1 // loop_header_branch
      %27 = sbr.rel (%p25) target = $region8
    $region5: #{tpu_custom_call.1} parent=1 // loop_body
      %s29 = ssub.s32 %s24, 1
      %s30 = ssub.s32 %s24, 2
      %s37 = sadd.s32 1, %s32
      %p38 = scmp.ge.s32.totalorder %s37, 2
      %s39 = scalar_select %p38, 0, %s37
      %s40 = sadd.s32 1, %s31
      %s41 = scalar_select %p38, %s40, %s31
      %p42 = scmp.ge.s32.totalorder %s41, 1
      %s43 = scalar_select %p42, 0, %s41
      %s44 = ssub.s32 %s31, %s43
      %s45 = ssub.s32 %s32, %s39
      %s46 = sor.u32 %s44, %s45
      %p47 = scmp.eq.s32.totalorder %s46, 0
      %s49 = sadd.s32 %s48, 1
      %s50 = scalar_select %p47, %s48, %s49
      %p53 = pneg %p47
      %p54 = scmp.eq.s32.totalorder %s24, 1
      %p55 = por %p53, %p54
      %p56 = scmp.ne.s32.totalorder %s48, %s51
      %p57 = scmp.eq.s32.totalorder %s24, 0
      %p58 = por %p56, %p57
      %p59 = scmp.ne.s32.totalorder %s48, %s51
      %p60 = scmp.eq.s32.totalorder %s29, 1
      %p61 = por %p59, %p60
      %p62 = scmp.ne.s32.totalorder %s51, %s52
      %p63 = scmp.eq.s32.totalorder %s29, 0
      %p64 = por %p62, %p63
      %p65 = scmp.ne.s32.totalorder %s51, %s52
      %p66 = scmp.eq.s32.totalorder %s30, 1
      %p67 = por %p65, %p66
      %p69 = scmp.ne.s32.totalorder %s52, %s68
      %p70 = scmp.eq.s32.totalorder %s30, 0
      %p71 = por %p69, %p70
      %s72 = ssub.s32 %s31, %s43
      %s73 = ssub.s32 %s32, %s39
      %s74 = sor.u32 %s72, %s73
      %p75 = scmp.eq.s32.totalorder %s74, 0
      %s77 = sadd.s32 %s76, 1
      %s78 = scalar_select %p75, %s76, %s77
      %p81 = pneg %p75
      %p82 = scmp.eq.s32.totalorder %s24, 1
      %p83 = por %p81, %p82
      %p84 = scmp.ne.s32.totalorder %s76, %s79
      %p85 = scmp.eq.s32.totalorder %s24, 0
      %p86 = por %p84, %p85
      %p87 = scmp.ne.s32.totalorder %s76, %s79
      %p88 = scmp.eq.s32.totalorder %s29, 1
      %p89 = por %p87, %p88
      %p90 = scmp.ne.s32.totalorder %s79, %s80
      %p91 = scmp.eq.s32.totalorder %s29, 0
      %p92 = por %p90, %p91
      %p93 = scmp.ne.s32.totalorder %s79, %s80
      %p94 = scmp.eq.s32.totalorder %s30, 1
      %p95 = por %p93, %p94
      %p97 = scmp.ne.s32.totalorder %s80, %s96
      %p98 = scmp.eq.s32.totalorder %s30, 0
      %p99 = por %p97, %p98
      %s101 = sadd.s32 %s100, 1
      %p104 = scmp.eq.s32.totalorder %s24, 1
      %p105 = scmp.ne.s32.totalorder %s100, %s102
      %p106 = scmp.eq.s32.totalorder %s24, 0
      %p107 = por %p105, %p106
      %p108 = scmp.ne.s32.totalorder %s100, %s102
      %p109 = scmp.eq.s32.totalorder %s29, 1
      %p110 = por %p108, %p109
      %p111 = scmp.ne.s32.totalorder %s102, %s103
      %p112 = scmp.eq.s32.totalorder %s29, 0
      %p113 = por %p111, %p112
      %p114 = scmp.ne.s32.totalorder %s102, %s103
      %p115 = scmp.eq.s32.totalorder %s30, 1
      %p116 = por %p114, %p115
      %p118 = scmp.ne.s32.totalorder %s103, %s117
      %p119 = scmp.eq.s32.totalorder %s30, 0
      %p120 = por %p118, %p119
      %s122 = sadd.s32 %s121, 1
      %p125 = scmp.eq.s32.totalorder %s24, 1
      %p126 = scmp.ne.s32.totalorder %s121, %s123
      %p127 = scmp.eq.s32.totalorder %s24, 0
      %p128 = por %p126, %p127
      %p129 = scmp.ne.s32.totalorder %s121, %s123
      %p130 = scmp.eq.s32.totalorder %s29, 1
      %p131 = por %p129, %p130
      %p132 = scmp.ne.s32.totalorder %s123, %s124
      %p133 = scmp.eq.s32.totalorder %s29, 0
      %p134 = por %p132, %p133
      %p135 = scmp.ne.s32.totalorder %s123, %s124
      %p136 = scmp.eq.s32.totalorder %s30, 1
      %p137 = por %p135, %p136
      %p139 = scmp.ne.s32.totalorder %s124, %s138
      %p140 = scmp.eq.s32.totalorder %s30, 0
      %p141 = por %p139, %p140
      %s143 = sadd.s32 %s142, 1
      %p146 = scmp.eq.s32.totalorder %s24, 1
      %p147 = scmp.ne.s32.totalorder %s142, %s144
      %p148 = scmp.eq.s32.totalorder %s24, 0
      %p149 = por %p147, %p148
      %p150 = scmp.ne.s32.totalorder %s142, %s144
      %p151 = scmp.eq.s32.totalorder %s29, 1
      %p152 = por %p150, %p151
      %p153 = scmp.ne.s32.totalorder %s144, %s145
      %p154 = scmp.eq.s32.totalorder %s29, 0
      %p155 = por %p153, %p154
      %p156 = scmp.ne.s32.totalorder %s144, %s145
      %p157 = scmp.eq.s32.totalorder %s30, 1
      %p158 = por %p156, %p157
      %p160 = scmp.ne.s32.totalorder %s145, %s159
      %p161 = scmp.eq.s32.totalorder %s30, 0
      %p162 = por %p160, %p161
      %s164 = sadd.s32 %s163, 1
      %p167 = scmp.eq.s32.totalorder %s24, 1
      %p168 = scmp.ne.s32.totalorder %s163, %s165
      %p169 = scmp.eq.s32.totalorder %s24, 0
      %p170 = por %p168, %p169
      %p171 = scmp.ne.s32.totalorder %s163, %s165
      %p172 = scmp.eq.s32.totalorder %s29, 1
      %p173 = por %p171, %p172
      %p174 = scmp.ne.s32.totalorder %s165, %s166
      %p175 = scmp.eq.s32.totalorder %s29, 0
      %p176 = por %p174, %p175
      %p177 = scmp.ne.s32.totalorder %s165, %s166
      %p178 = scmp.eq.s32.totalorder %s30, 1
      %p179 = por %p177, %p178
      %p181 = scmp.ne.s32.totalorder %s166, %s180
      %p182 = scmp.eq.s32.totalorder %s30, 0
      %p183 = por %p181, %p182
      %s185 = sadd.s32 %s184, 1
      %p188 = scmp.eq.s32.totalorder %s24, 1
      %p189 = scmp.ne.s32.totalorder %s184, %s186
      %p190 = scmp.eq.s32.totalorder %s24, 0
      %p191 = por %p189, %p190
      %p192 = scmp.ne.s32.totalorder %s184, %s186
      %p193 = scmp.eq.s32.totalorder %s29, 1
      %p194 = por %p192, %p193
      %p195 = scmp.ne.s32.totalorder %s186, %s187
      %p196 = scmp.eq.s32.totalorder %s29, 0
      %p197 = por %p195, %p196
      %p198 = scmp.ne.s32.totalorder %s186, %s187
      %p199 = scmp.eq.s32.totalorder %s30, 1
      %p200 = por %p198, %p199
      %p202 = scmp.ne.s32.totalorder %s187, %s201
      %p203 = scmp.eq.s32.totalorder %s30, 0
      %p204 = por %p202, %p203
      %s206 = sadd.s32 %s205, 1
      %p209 = scmp.eq.s32.totalorder %s24, 1
      %p210 = scmp.ne.s32.totalorder %s205, %s207
      %p211 = scmp.eq.s32.totalorder %s24, 0
      %p212 = por %p210, %p211
      %p213 = scmp.ne.s32.totalorder %s205, %s207
      %p214 = scmp.eq.s32.totalorder %s29, 1
      %p215 = por %p213, %p214
      %p216 = scmp.ne.s32.totalorder %s207, %s208
      %p217 = scmp.eq.s32.totalorder %s29, 0
      %p218 = por %p216, %p217
      %p219 = scmp.ne.s32.totalorder %s207, %s208
      %p220 = scmp.eq.s32.totalorder %s30, 1
      %p221 = por %p219, %p220
      %p223 = scmp.ne.s32.totalorder %s208, %s222
      %p224 = scmp.eq.s32.totalorder %s30, 0
      %p225 = por %p223, %p224
      %s227 = sadd.s32 %s226, 1
      %p230 = scmp.eq.s32.totalorder %s24, 1
      %p231 = scmp.ne.s32.totalorder %s226, %s228
      %p232 = scmp.eq.s32.totalorder %s24, 0
      %p233 = por %p231, %p232
      %p234 = scmp.ne.s32.totalorder %s226, %s228
      %p235 = scmp.eq.s32.totalorder %s29, 1
      %p236 = por %p234, %p235
      %p237 = scmp.ne.s32.totalorder %s228, %s229
      %p238 = scmp.eq.s32.totalorder %s29, 0
      %p239 = por %p237, %p238
      %p240 = scmp.ne.s32.totalorder %s228, %s229
      %p241 = scmp.eq.s32.totalorder %s30, 1
      %p242 = por %p240, %p241
      %p244 = scmp.ne.s32.totalorder %s229, %s243
      %p245 = scmp.eq.s32.totalorder %s30, 0
      %p246 = por %p244, %p245
      %s248 = sadd.s32 %s247, 1
      %p251 = scmp.eq.s32.totalorder %s24, 1
      %p252 = scmp.ne.s32.totalorder %s247, %s249
      %p253 = scmp.eq.s32.totalorder %s24, 0
      %p254 = por %p252, %p253
      %p255 = scmp.ne.s32.totalorder %s247, %s249
      %p256 = scmp.eq.s32.totalorder %s29, 1
      %p257 = por %p255, %p256
      %p258 = scmp.ne.s32.totalorder %s249, %s250
      %p259 = scmp.eq.s32.totalorder %s29, 0
      %p260 = por %p258, %p259
      %p261 = scmp.ne.s32.totalorder %s249, %s250
      %p262 = scmp.eq.s32.totalorder %s30, 1
      %p263 = por %p261, %p262
      %p265 = scmp.ne.s32.totalorder %s250, %s264
      %p266 = scmp.eq.s32.totalorder %s30, 0
      %p267 = por %p265, %p266
      %s268 = ssub.s32 %s31, %s43
      %p269 = scmp.eq.s32.totalorder %s268, 0
      %s271 = sadd.s32 %s270, 1
      %s272 = scalar_select %p269, %s270, %s271
      %p275 = pneg %p269
      %p276 = scmp.eq.s32.totalorder %s24, 1
      %p277 = por %p275, %p276
      %p278 = scmp.ne.s32.totalorder %s270, %s273
      %p279 = scmp.eq.s32.totalorder %s24, 0
      %p280 = por %p278, %p279
      %p281 = scmp.ne.s32.totalorder %s270, %s273
      %p282 = scmp.eq.s32.totalorder %s29, 1
      %p283 = por %p281, %p282
      %p284 = scmp.ne.s32.totalorder %s273, %s274
      %p285 = scmp.eq.s32.totalorder %s29, 0
      %p286 = por %p284, %p285
      %p287 = scmp.ne.s32.totalorder %s273, %s274
      %p288 = scmp.eq.s32.totalorder %s30, 1
      %p289 = por %p287, %p288
      %p291 = scmp.ne.s32.totalorder %s274, %s290
      %p292 = scmp.eq.s32.totalorder %s30, 0
      %p293 = por %p291, %p292
      %p294 = scmp.le.s32.totalorder 1, %s24
      %p295 = scmp.lt.s32.totalorder %s24, 3
      %p296 = pnand %p294, %p295
      %p297 = pneg %p296
      // Predicated region
      $region9: #{tpu_custom_call.1} parent=5 // pred_check
        _
      $region10: #{tpu_custom_call.1} parent=5 // pred_check_branch
        %299 = sbr.rel (%p296) target = $region12
      $region11: #{tpu_custom_call.1} parent=5 // pred_region
        %s300 = ssub.s32 %s24, 1
        // Predicated region
        $region13: #{tpu_custom_call.1} parent=11 // pred_check
          %p301 = pneg %p113
        $region14: #{tpu_custom_call.1} parent=11 // pred_check_branch
          %303 = sbr.rel (%p301) target = $region16
        $region15: #{tpu_custom_call.1} parent=11 // pred_region
          %s305 = ssub.s32 256, 256
          %306 = vsyncadd [#allocation9], %s305
          %s307 = sshll.u32 [#allocation10], 4
          %s308 = int_to_ptr.vmem [resolvable:$true] %s307
          %313 = dma.hbm_to_vmem [thread:$0]  %s2, 256, %s308, [#allocation9], 128, 128, 8
        $region16: #{tpu_custom_call.1} parent=11 // pred_fallthru
          _
        // Predicated region
        $region17: #{tpu_custom_call.1} parent=11 // pred_check
          %p314 = pneg %p134
        $region18: #{tpu_custom_call.1} parent=11 // pred_check_branch
          %316 = sbr.rel (%p314) target = $region20
        $region19: #{tpu_custom_call.1} parent=11 // pred_region
          _
        $region20: #{tpu_custom_call.1} parent=11 // pred_fallthru
          _
        // Predicated region
        $region21: #{tpu_custom_call.1} parent=11 // pred_check
          %p317 = pneg %p155
        $region22: #{tpu_custom_call.1} parent=11 // pred_check_branch
          %319 = sbr.rel (%p317) target = $region24
        $region23: #{tpu_custom_call.1} parent=11 // pred_region
          _
        $region24: #{tpu_custom_call.1} parent=11 // pred_fallthru
          _
        // Predicated region
        $region25: #{tpu_custom_call.1} parent=11 // pred_check
          %p320 = pneg %p176
        $region26: #{tpu_custom_call.1} parent=11 // pred_check_branch
          %322 = sbr.rel (%p320) target = $region28
        $region27: #{tpu_custom_call.1} parent=11 // pred_region
          %s324 = ssub.s32 2048, 2048
          %325 = vsyncadd [#allocation12], %s324
          %s326 = sshll.u32 [#allocation11], 4
          %s327 = int_to_ptr.vmem [resolvable:$true] %s326
          %332 = dma.hbm_to_vmem [thread:$0]  %s5, 2048, %s327, [#allocation12], 128, 128, 8
        $region28: #{tpu_custom_call.1} parent=11 // pred_fallthru
          _
        // Predicated region
        $region29: #{tpu_custom_call.1} parent=11 // pred_check
          %p333 = pneg %p197
        $region30: #{tpu_custom_call.1} parent=11 // pred_check_branch
          %335 = sbr.rel (%p333) target = $region32
        $region31: #{tpu_custom_call.1} parent=11 // pred_region
          %s337 = ssub.s32 2048, 2048
          %338 = vsyncadd [#allocation12], %s337
          %s339 = sshll.u32 [#allocation13], 4
          %s340 = int_to_ptr.vmem [resolvable:$true] %s339
          %345 = dma.hbm_to_vmem [thread:$0]  %s6, 2048, %s340, [#allocation12], 128, 128, 8
        $region32: #{tpu_custom_call.1} parent=11 // pred_fallthru
          _
        // Predicated region
        $region33: #{tpu_custom_call.1} parent=11 // pred_check
          %p346 = pneg %p218
        $region34: #{tpu_custom_call.1} parent=11 // pred_check_branch
          %348 = sbr.rel (%p346) target = $region36
        $region35: #{tpu_custom_call.1} parent=11 // pred_region
          _
        $region36: #{tpu_custom_call.1} parent=11 // pred_fallthru
          _
        // Predicated region
        $region37: #{tpu_custom_call.1} parent=11 // pred_check
          %p349 = pneg %p239
        $region38: #{tpu_custom_call.1} parent=11 // pred_check_branch
          %351 = sbr.rel (%p349) target = $region40
        $region39: #{tpu_custom_call.1} parent=11 // pred_region
          _
        $region40: #{tpu_custom_call.1} parent=11 // pred_fallthru
          _
        // Predicated region
        $region41: #{tpu_custom_call.1} parent=11 // pred_check
          %p352 = pneg %p260
        $region42: #{tpu_custom_call.1} parent=11 // pred_check_branch
          %354 = sbr.rel (%p352) target = $region44
        $region43: #{tpu_custom_call.1} parent=11 // pred_region
          _
        $region44: #{tpu_custom_call.1} parent=11 // pred_fallthru
          _
      $region12: #{tpu_custom_call.1} parent=5 // pred_fallthru
        _
      %p355 = scmp.lt.s32.totalorder %s24, 2
      // Predicated region
      $region45: #{tpu_custom_call.1} parent=5 // pred_check
        %p356 = pneg %p355
      $region46: #{tpu_custom_call.1} parent=5 // pred_check_branch
        %358 = sbr.rel (%p356) target = $region48
      $region47: #{tpu_custom_call.1} parent=5 // pred_region
        // Predicated region
        $region49: #{tpu_custom_call.1} parent=47 // pred_check
          %p359 = pneg %p58
        $region50: #{tpu_custom_call.1} parent=47 // pred_check_branch
          %361 = sbr.rel (%p359) target = $region52
        $region51: #{tpu_custom_call.1} parent=47 // pred_region
          %s362 = sand.u32 %s48, 1
          %s363 = scalar_lea.sflag [#allocation6], %s362
          %s364 = sand.u32 %s48, 1
          %s365 = smul.addr %s364, 16
          %s366 = scalar_lea.vmem [#allocation5], %s365
          %s367 = smul.u32 2, %s31
          %s369 = ssub.s32 256, 256
          %370 = vsyncadd %s363, %s369
          %s371 = smul.addr %s367, 2
          %s372 = sadd.s32 %s32, %s371
          %s373 = smul.addr %s372, 128
          %s374 = scalar_lea.hbm %s0, %s373
          %s375 = sshll.u32 %s366, 4
          %s376 = int_to_ptr.vmem [resolvable:$true] %s375
          %381 = dma.hbm_to_vmem [thread:$0]  %s374, 256, %s376, %s363, 256, 128, 8
        $region52: #{tpu_custom_call.1} parent=47 // pred_fallthru
          _
        // Predicated region
        $region53: #{tpu_custom_call.1} parent=47 // pred_check
          %p382 = pneg %p86
        $region54: #{tpu_custom_call.1} parent=47 // pred_check_branch
          %384 = sbr.rel (%p382) target = $region56
        $region55: #{tpu_custom_call.1} parent=47 // pred_region
          %s385 = sand.u32 %s24, 1
          %s386 = scalar_lea.sflag [#allocation9], %s385
          %s387 = sand.u32 %s76, 1
          %s388 = smul.addr %s387, 16
          %s389 = scalar_lea.vmem [#allocation8], %s388
          %s390 = smul.u32 2, %s31
          %s392 = ssub.s32 256, 256
          %393 = vsyncadd %s386, %s392
          %s394 = smul.addr %s390, 2
          %s395 = sadd.s32 %s32, %s394
          %s396 = smul.addr %s395, 128
          %s397 = scalar_lea.hbm %s1, %s396
          %s398 = sshll.u32 %s389, 4
          %s399 = int_to_ptr.vmem [resolvable:$true] %s398
          %404 = dma.hbm_to_vmem [thread:$0]  %s397, 256, %s399, %s386, 256, 128, 8
        $region56: #{tpu_custom_call.1} parent=47 // pred_fallthru
          _
      $region48: #{tpu_custom_call.1} parent=5 // pred_fallthru
        _
      %p405 = scmp.le.s32.totalorder 1, %s24
      %p406 = scmp.lt.s32.totalorder %s24, 3
      %p407 = pnand %p405, %p406
      %p408 = pneg %p407
      // Predicated region
      $region57: #{tpu_custom_call.1} parent=5 // pred_check
        _
      $region58: #{tpu_custom_call.1} parent=5 // pred_check_branch
        %410 = sbr.rel (%p407) target = $region60
      $region59: #{tpu_custom_call.1} parent=5 // pred_region
        %s411 = ssub.s32 %s24, 1
        %s412 = sand.u32 %s51, 1
        %s413 = scalar_lea.sflag [#allocation6], %s412
        %s414 = sand.u32 %s51, 1
        %s415 = smul.addr %s414, 16
        %s416 = scalar_lea.vmem [#allocation5], %s415
        // Predicated region
        $region61: #{tpu_custom_call.1} parent=59 // pred_check
          %p417 = pneg %p64
        $region62: #{tpu_custom_call.1} parent=59 // pred_check_branch
          %419 = sbr.rel (%p417) target = $region64
        $region63: #{tpu_custom_call.1} parent=59 // pred_region
          %420 = dma.done %s413, 256
        $region64: #{tpu_custom_call.1} parent=59 // pred_fallthru
          _
        %s421 = sand.u32 %s29, 1
        %s422 = scalar_lea.sflag [#allocation9], %s421
        %s423 = sand.u32 %s79, 1
        %s424 = smul.addr %s423, 16
        %s425 = scalar_lea.vmem [#allocation8], %s424
        // Predicated region
        $region65: #{tpu_custom_call.1} parent=59 // pred_check
          %p426 = pneg %p92
        $region66: #{tpu_custom_call.1} parent=59 // pred_check_branch
          %428 = sbr.rel (%p426) target = $region68
        $region67: #{tpu_custom_call.1} parent=59 // pred_region
          %429 = dma.done %s422, 256
        $region68: #{tpu_custom_call.1} parent=59 // pred_fallthru
          _
        // Predicated region
        $region69: #{tpu_custom_call.1} parent=59 // pred_check
          %p430 = pneg %p113
        $region70: #{tpu_custom_call.1} parent=59 // pred_check_branch
          %432 = sbr.rel (%p430) target = $region72
        $region71: #{tpu_custom_call.1} parent=59 // pred_region
          %433 = dma.done [#allocation9], 256
        $region72: #{tpu_custom_call.1} parent=59 // pred_fallthru
          _
        // Predicated region
        $region73: #{tpu_custom_call.1} parent=59 // pred_check
          %p434 = pneg %p176
        $region74: #{tpu_custom_call.1} parent=59 // pred_check_branch
          %436 = sbr.rel (%p434) target = $region76
        $region75: #{tpu_custom_call.1} parent=59 // pred_region
          %437 = dma.done [#allocation12], 2048
        $region76: #{tpu_custom_call.1} parent=59 // pred_fallthru
          _
        // Predicated region
        $region77: #{tpu_custom_call.1} parent=59 // pred_check
          %p438 = pneg %p197
        $region78: #{tpu_custom_call.1} parent=59 // pred_check_branch
          %440 = sbr.rel (%p438) target = $region80
        $region79: #{tpu_custom_call.1} parent=59 // pred_region
          %441 = dma.done [#allocation12], 2048
        $region80: #{tpu_custom_call.1} parent=59 // pred_fallthru
          _
        %s442 = sand.u32 %s51, 1
        %s443 = scalar_lea.sflag [#allocation6], %s442
        %s444 = sand.u32 %s51, 1
        %s445 = smul.addr %s444, 16
        %s446 = scalar_lea.vmem [#allocation5], %s445
        %p447 = pneg %p64
        %p448 = pneg %p61
        %s449 = sand.u32 %s29, 1
        %s450 = scalar_lea.sflag [#allocation9], %s449
        %s451 = sand.u32 %s79, 1
        %s452 = smul.addr %s451, 16
        %s453 = scalar_lea.vmem [#allocation8], %s452
        %p454 = pneg %p92
        %p455 = pneg %p89
        %p456 = pneg %p113
        %p457 = pneg %p110
        %p458 = pneg %p134
        %p459 = pneg %p131
        %p460 = pneg %p155
        %p461 = pneg %p152
        %p462 = pneg %p176
        %p463 = pneg %p173
        %p464 = pneg %p197
        %p465 = pneg %p194
        %p466 = pneg %p218
        %p467 = pneg %p215
        %p468 = pneg %p239
        %p469 = pneg %p236
        %p470 = pneg %p260
        %p471 = pneg %p257
        %p472 = pneg %p286
        %p473 = pneg %p283
        %s474 = smul.u32 2, %s33
        %s475 = smul.u32 2, %s33
        %p476 = scmp.eq.s32.totalorder %s34, 0
        // Predicated region
        $region81: #{tpu_custom_call.1} parent=59 // pred_check
          %p477 = pneg %p476
        $region82: #{tpu_custom_call.1} parent=59 // pred_check_branch
          %479 = sbr.rel (%p477) target = $region84
        $region83: #{tpu_custom_call.1} parent=59 // pred_region
          %480 = vst [vmem:[#allocation2] sm:$0x3] 0.0
          %481 = vst [vmem:[#allocation2 + $0x2] sm:$0x3] 0.0
        $region84: #{tpu_custom_call.1} parent=59 // pred_fallthru
          _
        %v482 = vld [vmem:[%s416] sm:$0xff]
        %v483 = vld [vmem:[%s416 + $0x8] sm:$0xff]
        %v484 = vld [vmem:[%s425] sm:$0xff]
        %v485 = vld [vmem:[%s425 + $0x8] sm:$0xff]
        %v486 = vmul.f32 %v484, 0.1
        %v487 = vmul.f32 %v485, 0.1
        %v488 = vadd.f32 %v482, %v486
        %v489 = vadd.f32 %v483, %v487
        %v490 = vld [vmem:[#allocation10] sm:$0xff]
        %v491 = vld [vmem:[#allocation10 + $0x8] sm:$0xff]
        %v492 = vld [vmem:[%s3] sm:$0xff]
        %v493 = vld [vmem:[%s3 + $0x8] sm:$0xff]
        %v494 = vld [vmem:[%s3 + $0x10] sm:$0xff]
        %v495 = vld [vmem:[%s3 + $0x18] sm:$0xff]
        %v496 = vld [vmem:[%s3 + $0x20] sm:$0xff]
        %v497 = vld [vmem:[%s3 + $0x28] sm:$0xff]
        %v498 = vld [vmem:[%s3 + $0x30] sm:$0xff]
        %v499 = vld [vmem:[%s3 + $0x38] sm:$0xff]
        %v500 = vld [vmem:[%s3 + $0x40] sm:$0xff]
        %v501 = vld [vmem:[%s3 + $0x48] sm:$0xff]
        %v502 = vld [vmem:[%s3 + $0x50] sm:$0xff]
        %v503 = vld [vmem:[%s3 + $0x58] sm:$0xff]
        %v504 = vld [vmem:[%s3 + $0x60] sm:$0xff]
        %v505 = vld [vmem:[%s3 + $0x68] sm:$0xff]
        %v506 = vld [vmem:[%s3 + $0x70] sm:$0xff]
        %v507 = vld [vmem:[%s3 + $0x78] sm:$0xff]
        %v508 = vld [vmem:[%s4] sm:$0x1]
        %v510 = vlaneseq
        %v511 = vshrl.u32 %v510, 7
        %v512 = vsub.s32 0, %v511
        %v513 = vrot.slane %v508, %v512
        %vm515 = vcmask 130048
        %v517 = vsel %vm515, %v488, 0
        %v520 = vsel %vm515, %v489, 0
        %522 = vmatprep.subr.mxu0 0.0
        %523 = vmatpush1.msra.mxu0 %v490
        %524 = vmatprep.subr.mxu0 0.0
        %525 = vmatpush1.msra.mxu0 %v491
        %526 = vmatprep.subr.mxu0 0.0
        %527 = vmatpush1.msra.mxu0 0.0
        %528 = vmatprep.subr.mxu0 0.0
        %529 = vmatpush1.msra.mxu0 0.0
        %530 = vmatprep.subr.mxu0 0.0
        %531 = vmatpush1.msra.mxu0 0.0
        %532 = vmatprep.subr.mxu0 0.0
        %533 = vmatpush1.msra.mxu0 0.0
        %534 = vmatprep.subr.mxu0 0.0
        %535 = vmatpush1.msra.mxu0 0.0
        %536 = vmatprep.subr.mxu0 0.0
        %537 = vmatpush1.msra.mxu0 0.0
        %538 = vmatprep.subr.mxu0 0.0
        %539 = vmatpush1.msra.mxu0 0.0
        %540 = vmatprep.subr.mxu0 0.0
        %541 = vmatpush1.msra.mxu0 0.0
        %542 = vmatprep.subr.mxu0 0.0
        %543 = vmatpush1.msra.mxu0 0.0
        %544 = vmatprep.subr.mxu0 0.0
        %545 = vmatpush1.msra.mxu0 0.0
        %546 = vmatprep.subr.mxu0 0.0
        %547 = vmatpush1.msra.mxu0 0.0
        %548 = vmatprep.subr.mxu0 0.0
        %549 = vmatpush1.msra.mxu0 0.0
        %550 = vmatprep.subr.mxu0 0.0
        %551 = vmatpush1.msra.mxu0 0.0
        %552 = vmatprep.subr.mxu0 0.0
        %553 = vmatpush1.msra.mxu0 0.0
        %554 = vmatprep.subr.mxu0 0.0
        %555 = vmatpush1.msra.mxu0 0.0
        %556 = vmatprep.subr.mxu0 0.0
        %557 = vmatpush1.msra.mxu0 0.0
        %558 = vmatprep.subr.mxu0 0.0
        %559 = vmatpush1.msra.mxu0 0.0
        %560 = vmatprep.subr.mxu0 0.0
        %561 = vmatpush1.msra.mxu0 0.0
        %562 = vmatprep.subr.mxu0 0.0
        %563 = vmatpush1.msra.mxu0 0.0
        %564 = vmatprep.subr.mxu0 0.0
        %565 = vmatpush1.msra.mxu0 0.0
        %566 = vmatprep.subr.mxu0 0.0
        %567 = vmatpush1.msra.mxu0 0.0
        %568 = vmatprep.subr.mxu0 0.0
        %569 = vmatpush1.msra.mxu0 0.0
        %570 = vmatprep.subr.mxu0 0.0
        %571 = vmatpush1.msra.mxu0 0.0
        %572 = vmatprep.subr.mxu0 0.0
        %573 = vmatpush1.msra.mxu0 0.0
        %574 = vmatprep.subr.mxu0 0.0
        %575 = vmatpush1.msra.mxu0 0.0
        %576 = vmatprep.subr.mxu0 0.0
        %577 = vmatpush1.msra.mxu0 0.0
        %578 = vmatprep.subr.mxu0 0.0
        %579 = vmatpush1.msra.mxu0 0.0
        %580 = vmatprep.subr.mxu0 0.0
        %581 = vmatpush1.msra.mxu0 0.0
        %582 = vmatprep.subr.mxu0 0.0
        %583 = vmatpush1.msra.mxu0 0.0
        %584 = vmatprep.subr.mxu0 0.0
        %585 = vmatpush1.msra.mxu0 0.0
        %586 = vmatprep.mubr.f32.mxu0 0.0
        %587 = vmatmul.mubr.f32.gmra.mrb[0].mxu0 %v517
        %v588 = vpop.f32.mrb[0].mxu0
        %v589 = vadd.f32 %v513, %v588
        %v590 = vpop.f32.mrb[0].mxu0
        %591 = vmatprep.mubr.f32.mxu0 0.0
        %592 = vmatmul.mubr.f32.gmra.mrb[0].mxu0 %v520
        %v593 = vpop.f32.mrb[0].mxu0
        %v594 = vadd.f32 %v513, %v593
        %v595 = vpop.f32.mrb[0].mxu0
        %596 = vdwg.mxu0
        %v597 = vcombine.high %v589, 0.0
        %v599 = vunpack.c.l.s4 1983009808
        %v600 = vunpack.c.0.s8 %v599
        %v601 = vlaneseq
        %v602 = vshrl.u32 %v601, 7
        %v603 = vsub.s32 %v600, %v602
        %v604 = vrot.slane %v589, %v603
        %v606 = vunpack.c.l.s4 1983009808
        %v607 = vunpack.c.0.s8 %v606
        %v608 = vlaneseq
        %v609 = vshrl.u32 %v608, 7
        %v610 = vsub.s32 %v607, %v609
        %v611 = vrot.slane %v597, %v610
        %v612 = vcombine.high %v594, 0.0
        %v614 = vunpack.c.l.s4 1983009808
        %v615 = vunpack.c.0.s8 %v614
        %v616 = vlaneseq
        %v617 = vshrl.u32 %v616, 7
        %v618 = vsub.s32 %v615, %v617
        %v619 = vrot.slane %v594, %v618
        %v621 = vunpack.c.l.s4 1983009808
        %v622 = vunpack.c.0.s8 %v621
        %v623 = vlaneseq
        %v624 = vshrl.u32 %v623, 7
        %v625 = vsub.s32 %v622, %v624
        %v626 = vrot.slane %v612, %v625
        %v627 = vcombine.low %v604, %v619
        %v628 = vcombine.high %v604, %v619
        %v630 = vunpack.c.l.s4 1934713408
        %v631 = vunpack.c.0.s8 %v630
        %v632 = vlaneseq
        %v633 = vshrl.u32 %v632, 7
        %v634 = vsub.s32 %v631, %v633
        %v635 = vrot.slane %v627, %v634
        %v637 = vunpack.c.l.s4 1934713408
        %v638 = vunpack.c.0.s8 %v637
        %v639 = vlaneseq
        %v640 = vshrl.u32 %v639, 7
        %v641 = vsub.s32 %v638, %v640
        %v642 = vrot.slane %v628, %v641
        %v643 = vcombine.low %v611, %v626
        %v644 = vcombine.high %v611, %v626
        %v646 = vunpack.c.l.s4 1934713408
        %v647 = vunpack.c.0.s8 %v646
        %v648 = vlaneseq
        %v649 = vshrl.u32 %v648, 7
        %v650 = vsub.s32 %v647, %v649
        %v651 = vrot.slane %v643, %v650
        %v653 = vunpack.c.l.s4 1934713408
        %v654 = vunpack.c.0.s8 %v653
        %v655 = vlaneseq
        %v656 = vshrl.u32 %v655, 7
        %v657 = vsub.s32 %v654, %v656
        %v658 = vrot.slane %v644, %v657
        %v659 = vcombine.high %v635, 0.0
        %v660 = vcombine.high %v642, 0.0
        %v661 = vcombine.high %v651, 0.0
        %v662 = vcombine.high %v658, 0.0
        %663 = vst [vmem:[#allocation3] sm:$0x3] %v635
        %664 = vst [vmem:[#allocation3 + $0x2] sm:$0x3] %v659
        %665 = vst [vmem:[#allocation3 + $0x4] sm:$0x3] %v642
        %666 = vst [vmem:[#allocation3 + $0x6] sm:$0x3] %v660
        %667 = vst [vmem:[#allocation3 + $0x8] sm:$0x3] %v651
        %668 = vst [vmem:[#allocation3 + $0xa] sm:$0x3] %v661
        %669 = vst [vmem:[#allocation3 + $0xc] sm:$0x3] %v658
        %670 = vst [vmem:[#allocation3 + $0xe] sm:$0x3] %v662
        %v671 = vld [vmem:[#allocation2] sm:$0x3]
        %v672 = vld [vmem:[#allocation3] sm:$0x3]
        %673 = vmatprep.subr.mxu0 0.0
        %674 = vmatpush1.msra.mxu0 %v492
        %675 = vmatprep.subr.mxu0 0.0
        %676 = vmatpush1.msra.mxu0 %v493
        %677 = vmatprep.subr.mxu0 0.0
        %678 = vmatpush1.msra.mxu0 %v494
        %679 = vmatprep.subr.mxu0 0.0
        %680 = vmatpush1.msra.mxu0 %v495
        %681 = vmatprep.subr.mxu0 0.0
        %682 = vmatpush1.msra.mxu0 %v496
        %683 = vmatprep.subr.mxu0 0.0
        %684 = vmatpush1.msra.mxu0 %v497
        %685 = vmatprep.subr.mxu0 0.0
        %686 = vmatpush1.msra.mxu0 %v498
        %687 = vmatprep.subr.mxu0 0.0
        %688 = vmatpush1.msra.mxu0 %v499
        %689 = vmatprep.subr.mxu0 0.0
        %690 = vmatpush1.msra.mxu0 %v500
        %691 = vmatprep.subr.mxu0 0.0
        %692 = vmatpush1.msra.mxu0 %v501
        %693 = vmatprep.subr.mxu0 0.0
        %694 = vmatpush1.msra.mxu0 %v502
        %695 = vmatprep.subr.mxu0 0.0
        %696 = vmatpush1.msra.mxu0 %v503
        %697 = vmatprep.subr.mxu0 0.0
        %698 = vmatpush1.msra.mxu0 %v504
        %699 = vmatprep.subr.mxu0 0.0
        %700 = vmatpush1.msra.mxu0 %v505
        %701 = vmatprep.subr.mxu0 0.0
        %702 = vmatpush1.msra.mxu0 %v506
        %703 = vmatprep.subr.mxu0 0.0
        %704 = vmatpush1.msra.mxu0 %v507
        %705 = vmatprep.subr.mxu0 0.0
        %706 = vmatpush1.msra.mxu0 0.0
        %707 = vmatprep.subr.mxu0 0.0
        %708 = vmatpush1.msra.mxu0 0.0
        %709 = vmatprep.subr.mxu0 0.0
        %710 = vmatpush1.msra.mxu0 0.0
        %711 = vmatprep.subr.mxu0 0.0
        %712 = vmatpush1.msra.mxu0 0.0
        %713 = vmatprep.subr.mxu0 0.0
        %714 = vmatpush1.msra.mxu0 0.0
        %715 = vmatprep.subr.mxu0 0.0
        %716 = vmatpush1.msra.mxu0 0.0
        %717 = vmatprep.subr.mxu0 0.0
        %718 = vmatpush1.msra.mxu0 0.0
        %719 = vmatprep.subr.mxu0 0.0
        %720 = vmatpush1.msra.mxu0 0.0
        %721 = vmatprep.subr.mxu0 0.0
        %722 = vmatpush1.msra.mxu0 0.0
        %723 = vmatprep.subr.mxu0 0.0
        %724 = vmatpush1.msra.mxu0 0.0
        %725 = vmatprep.subr.mxu0 0.0
        %726 = vmatpush1.msra.mxu0 0.0
        %727 = vmatprep.subr.mxu0 0.0
        %728 = vmatpush1.msra.mxu0 0.0
        %729 = vmatprep.subr.mxu0 0.0
        %730 = vmatpush1.msra.mxu0 0.0
        %731 = vmatprep.subr.mxu0 0.0
        %732 = vmatpush1.msra.mxu0 0.0
        %733 = vmatprep.subr.mxu0 0.0
        %734 = vmatpush1.msra.mxu0 0.0
        %735 = vmatprep.subr.mxu0 0.0
        %736 = vmatpush1.msra.mxu0 0.0
        %737 = vmatprep.mubr.f32.mxu0 0.0
        %738 = vmatmul.mubr.f32.gmra.mrb[0].mxu0 %v671
        %v739 = vpop.f32.mrb[0].mxu0
        %v740 = vadd.f32 0.0, %v739
        %v741 = vpop.f32.mrb[0].mxu0
        %742 = vdwg.mxu0
        %v743 = vadd.f32 %v672, %v740
        %v744 = vtanh.pop %v743
        %745 = vst [vmem:[#allocation4] sm:$0x3] %v744
        %s746 = scalar_lea.vmem [#allocation3], 2
        %v747 = vld [vmem:[%s746] sm:$0x3]
        %748 = vmatprep.subr.mxu0 0.0
        %749 = vmatpush1.msra.mxu0 %v492
        %750 = vmatprep.subr.mxu0 0.0
        %751 = vmatpush1.msra.mxu0 %v493
        %752 = vmatprep.subr.mxu0 0.0
        %753 = vmatpush1.msra.mxu0 %v494
        %754 = vmatprep.subr.mxu0 0.0
        %755 = vmatpush1.msra.mxu0 %v495
        %756 = vmatprep.subr.mxu0 0.0
        %757 = vmatpush1.msra.mxu0 %v496
        %758 = vmatprep.subr.mxu0 0.0
        %759 = vmatpush1.msra.mxu0 %v497
        %760 = vmatprep.subr.mxu0 0.0
        %761 = vmatpush1.msra.mxu0 %v498
        %762 = vmatprep.subr.mxu0 0.0
        %763 = vmatpush1.msra.mxu0 %v499
        %764 = vmatprep.subr.mxu0 0.0
        %765 = vmatpush1.msra.mxu0 %v500
        %766 = vmatprep.subr.mxu0 0.0
        %767 = vmatpush1.msra.mxu0 %v501
        %768 = vmatprep.subr.mxu0 0.0
        %769 = vmatpush1.msra.mxu0 %v502
        %770 = vmatprep.subr.mxu0 0.0
        %771 = vmatpush1.msra.mxu0 %v503
        %772 = vmatprep.subr.mxu0 0.0
        %773 = vmatpush1.msra.mxu0 %v504
        %774 = vmatprep.subr.mxu0 0.0
        %775 = vmatpush1.msra.mxu0 %v505
        %776 = vmatprep.subr.mxu0 0.0
        %777 = vmatpush1.msra.mxu0 %v506
        %778 = vmatprep.subr.mxu0 0.0
        %779 = vmatpush1.msra.mxu0 %v507
        %780 = vmatprep.subr.mxu0 0.0
        %781 = vmatpush1.msra.mxu0 0.0
        %782 = vmatprep.subr.mxu0 0.0
        %783 = vmatpush1.msra.mxu0 0.0
        %784 = vmatprep.subr.mxu0 0.0
        %785 = vmatpush1.msra.mxu0 0.0
        %786 = vmatprep.subr.mxu0 0.0
        %787 = vmatpush1.msra.mxu0 0.0
        %788 = vmatprep.subr.mxu0 0.0
        %789 = vmatpush1.msra.mxu0 0.0
        %790 = vmatprep.subr.mxu0 0.0
        %791 = vmatpush1.msra.mxu0 0.0
        %792 = vmatprep.subr.mxu0 0.0
        %793 = vmatpush1.msra.mxu0 0.0
        %794 = vmatprep.subr.mxu0 0.0
        %795 = vmatpush1.msra.mxu0 0.0
        %796 = vmatprep.subr.mxu0 0.0
        %797 = vmatpush1.msra.mxu0 0.0
        %798 = vmatprep.subr.mxu0 0.0
        %799 = vmatpush1.msra.mxu0 0.0
        %800 = vmatprep.subr.mxu0 0.0
        %801 = vmatpush1.msra.mxu0 0.0
        %802 = vmatprep.subr.mxu0 0.0
        %803 = vmatpush1.msra.mxu0 0.0
        %804 = vmatprep.subr.mxu0 0.0
        %805 = vmatpush1.msra.mxu0 0.0
        %806 = vmatprep.subr.mxu0 0.0
        %807 = vmatpush1.msra.mxu0 0.0
        %808 = vmatprep.subr.mxu0 0.0
        %809 = vmatpush1.msra.mxu0 0.0
        %810 = vmatprep.subr.mxu0 0.0
        %811 = vmatpush1.msra.mxu0 0.0
        %812 = vmatprep.mubr.f32.mxu0 0.0
        %813 = vmatmul.mubr.f32.gmra.mrb[0].mxu0 %v744
        %v814 = vpop.f32.mrb[0].mxu0
        %v815 = vadd.f32 0.0, %v814
        %v816 = vpop.f32.mrb[0].mxu0
        %817 = vdwg.mxu0
        %v818 = vadd.f32 %v747, %v815
        %v819 = vtanh.pop %v818
        %s820 = scalar_lea.vmem [#allocation4], 2
        %821 = vst [vmem:[%s820] sm:$0x3] %v819
        %s822 = scalar_lea.vmem [#allocation3], 4
        %v823 = vld [vmem:[%s822] sm:$0x3]
        %824 = vmatprep.subr.mxu0 0.0
        %825 = vmatpush1.msra.mxu0 %v492
        %826 = vmatprep.subr.mxu0 0.0
        %827 = vmatpush1.msra.mxu0 %v493
        %828 = vmatprep.subr.mxu0 0.0
        %829 = vmatpush1.msra.mxu0 %v494
        %830 = vmatprep.subr.mxu0 0.0
        %831 = vmatpush1.msra.mxu0 %v495
        %832 = vmatprep.subr.mxu0 0.0
        %833 = vmatpush1.msra.mxu0 %v496
        %834 = vmatprep.subr.mxu0 0.0
        %835 = vmatpush1.msra.mxu0 %v497
        %836 = vmatprep.subr.mxu0 0.0
        %837 = vmatpush1.msra.mxu0 %v498
        %838 = vmatprep.subr.mxu0 0.0
        %839 = vmatpush1.msra.mxu0 %v499
        %840 = vmatprep.subr.mxu0 0.0
        %841 = vmatpush1.msra.mxu0 %v500
        %842 = vmatprep.subr.mxu0 0.0
        %843 = vmatpush1.msra.mxu0 %v501
        %844 = vmatprep.subr.mxu0 0.0
        %845 = vmatpush1.msra.mxu0 %v502
        %846 = vmatprep.subr.mxu0 0.0
        %847 = vmatpush1.msra.mxu0 %v503
        %848 = vmatprep.subr.mxu0 0.0
        %849 = vmatpush1.msra.mxu0 %v504
        %850 = vmatprep.subr.mxu0 0.0
        %851 = vmatpush1.msra.mxu0 %v505
        %852 = vmatprep.subr.mxu0 0.0
        %853 = vmatpush1.msra.mxu0 %v506
        %854 = vmatprep.subr.mxu0 0.0
        %855 = vmatpush1.msra.mxu0 %v507
        %856 = vmatprep.subr.mxu0 0.0
        %857 = vmatpush1.msra.mxu0 0.0
        %858 = vmatprep.subr.mxu0 0.0
        %859 = vmatpush1.msra.mxu0 0.0
        %860 = vmatprep.subr.mxu0 0.0
        %861 = vmatpush1.msra.mxu0 0.0
        %862 = vmatprep.subr.mxu0 0.0
        %863 = vmatpush1.msra.mxu0 0.0
        %864 = vmatprep.subr.mxu0 0.0
        %865 = vmatpush1.msra.mxu0 0.0
        %866 = vmatprep.subr.mxu0 0.0
        %867 = vmatpush1.msra.mxu0 0.0
        %868 = vmatprep.subr.mxu0 0.0
        %869 = vmatpush1.msra.mxu0 0.0
        %870 = vmatprep.subr.mxu0 0.0
        %871 = vmatpush1.msra.mxu0 0.0
        %872 = vmatprep.subr.mxu0 0.0
        %873 = vmatpush1.msra.mxu0 0.0
        %874 = vmatprep.subr.mxu0 0.0
        %875 = vmatpush1.msra.mxu0 0.0
        %876 = vmatprep.subr.mxu0 0.0
        %877 = vmatpush1.msra.mxu0 0.0
        %878 = vmatprep.subr.mxu0 0.0
        %879 = vmatpush1.msra.mxu0 0.0
        %880 = vmatprep.subr.mxu0 0.0
        %881 = vmatpush1.msra.mxu0 0.0
        %882 = vmatprep.subr.mxu0 0.0
        %883 = vmatpush1.msra.mxu0 0.0
        %884 = vmatprep.subr.mxu0 0.0
        %885 = vmatpush1.msra.mxu0 0.0
        %886 = vmatprep.subr.mxu0 0.0
        %887 = vmatpush1.msra.mxu0 0.0
        %888 = vmatprep.mubr.f32.mxu0 0.0
        %889 = vmatmul.mubr.f32.gmra.mrb[0].mxu0 %v819
        %v890 = vpop.f32.mrb[0].mxu0
        %v891 = vadd.f32 0.0, %v890
        %v892 = vpop.f32.mrb[0].mxu0
        %893 = vdwg.mxu0
        %v894 = vadd.f32 %v823, %v891
        %v895 = vtanh.pop %v894
        %s896 = scalar_lea.vmem [#allocation4], 4
        %897 = vst [vmem:[%s896] sm:$0x3] %v895
        %s898 = scalar_lea.vmem [#allocation3], 6
        %v899 = vld [vmem:[%s898] sm:$0x3]
        %900 = vmatprep.subr.mxu0 0.0
        %901 = vmatpush1.msra.mxu0 %v492
        %902 = vmatprep.subr.mxu0 0.0
        %903 = vmatpush1.msra.mxu0 %v493
        %904 = vmatprep.subr.mxu0 0.0
        %905 = vmatpush1.msra.mxu0 %v494
        %906 = vmatprep.subr.mxu0 0.0
        %907 = vmatpush1.msra.mxu0 %v495
        %908 = vmatprep.subr.mxu0 0.0
        %909 = vmatpush1.msra.mxu0 %v496
        %910 = vmatprep.subr.mxu0 0.0
        %911 = vmatpush1.msra.mxu0 %v497
        %912 = vmatprep.subr.mxu0 0.0
        %913 = vmatpush1.msra.mxu0 %v498
        %914 = vmatprep.subr.mxu0 0.0
        %915 = vmatpush1.msra.mxu0 %v499
        %916 = vmatprep.subr.mxu0 0.0
        %917 = vmatpush1.msra.mxu0 %v500
        %918 = vmatprep.subr.mxu0 0.0
        %919 = vmatpush1.msra.mxu0 %v501
        %920 = vmatprep.subr.mxu0 0.0
        %921 = vmatpush1.msra.mxu0 %v502
        %922 = vmatprep.subr.mxu0 0.0
        %923 = vmatpush1.msra.mxu0 %v503
        %924 = vmatprep.subr.mxu0 0.0
        %925 = vmatpush1.msra.mxu0 %v504
        %926 = vmatprep.subr.mxu0 0.0
        %927 = vmatpush1.msra.mxu0 %v505
        %928 = vmatprep.subr.mxu0 0.0
        %929 = vmatpush1.msra.mxu0 %v506
        %930 = vmatprep.subr.mxu0 0.0
        %931 = vmatpush1.msra.mxu0 %v507
        %932 = vmatprep.subr.mxu0 0.0
        %933 = vmatpush1.msra.mxu0 0.0
        %934 = vmatprep.subr.mxu0 0.0
        %935 = vmatpush1.msra.mxu0 0.0
        %936 = vmatprep.subr.mxu0 0.0
        %937 = vmatpush1.msra.mxu0 0.0
        %938 = vmatprep.subr.mxu0 0.0
        %939 = vmatpush1.msra.mxu0 0.0
        %940 = vmatprep.subr.mxu0 0.0
        %941 = vmatpush1.msra.mxu0 0.0
        %942 = vmatprep.subr.mxu0 0.0
        %943 = vmatpush1.msra.mxu0 0.0
        %944 = vmatprep.subr.mxu0 0.0
        %945 = vmatpush1.msra.mxu0 0.0
        %946 = vmatprep.subr.mxu0 0.0
        %947 = vmatpush1.msra.mxu0 0.0
        %948 = vmatprep.subr.mxu0 0.0
        %949 = vmatpush1.msra.mxu0 0.0
        %950 = vmatprep.subr.mxu0 0.0
        %951 = vmatpush1.msra.mxu0 0.0
        %952 = vmatprep.subr.mxu0 0.0
        %953 = vmatpush1.msra.mxu0 0.0
        %954 = vmatprep.subr.mxu0 0.0
        %955 = vmatpush1.msra.mxu0 0.0
        %956 = vmatprep.subr.mxu0 0.0
        %957 = vmatpush1.msra.mxu0 0.0
        %958 = vmatprep.subr.mxu0 0.0
        %959 = vmatpush1.msra.mxu0 0.0
        %960 = vmatprep.subr.mxu0 0.0
        %961 = vmatpush1.msra.mxu0 0.0
        %962 = vmatprep.subr.mxu0 0.0
        %963 = vmatpush1.msra.mxu0 0.0
        %964 = vmatprep.mubr.f32.mxu0 0.0
        %965 = vmatmul.mubr.f32.gmra.mrb[0].mxu0 %v895
        %v966 = vpop.f32.mrb[0].mxu0
        %v967 = vadd.f32 0.0, %v966
        %v968 = vpop.f32.mrb[0].mxu0
        %969 = vdwg.mxu0
        %v970 = vadd.f32 %v899, %v967
        %v971 = vtanh.pop %v970
        %s972 = scalar_lea.vmem [#allocation4], 6
        %973 = vst [vmem:[%s972] sm:$0x3] %v971
        %s974 = scalar_lea.vmem [#allocation3], 8
        %v975 = vld [vmem:[%s974] sm:$0x3]
        %976 = vmatprep.subr.mxu0 0.0
        %977 = vmatpush1.msra.mxu0 %v492
        %978 = vmatprep.subr.mxu0 0.0
        %979 = vmatpush1.msra.mxu0 %v493
        %980 = vmatprep.subr.mxu0 0.0
        %981 = vmatpush1.msra.mxu0 %v494
        %982 = vmatprep.subr.mxu0 0.0
        %983 = vmatpush1.msra.mxu0 %v495
        %984 = vmatprep.subr.mxu0 0.0
        %985 = vmatpush1.msra.mxu0 %v496
        %986 = vmatprep.subr.mxu0 0.0
        %987 = vmatpush1.msra.mxu0 %v497
        %988 = vmatprep.subr.mxu0 0.0
        %989 = vmatpush1.msra.mxu0 %v498
        %990 = vmatprep.subr.mxu0 0.0
        %991 = vmatpush1.msra.mxu0 %v499
        %992 = vmatprep.subr.mxu0 0.0
        %993 = vmatpush1.msra.mxu0 %v500
        %994 = vmatprep.subr.mxu0 0.0
        %995 = vmatpush1.msra.mxu0 %v501
        %996 = vmatprep.subr.mxu0 0.0
        %997 = vmatpush1.msra.mxu0 %v502
        %998 = vmatprep.subr.mxu0 0.0
        %999 = vmatpush1.msra.mxu0 %v503
        %1000 = vmatprep.subr.mxu0 0.0
        %1001 = vmatpush1.msra.mxu0 %v504
        %1002 = vmatprep.subr.mxu0 0.0
        %1003 = vmatpush1.msra.mxu0 %v505
        %1004 = vmatprep.subr.mxu0 0.0
        %1005 = vmatpush1.msra.mxu0 %v506
        %1006 = vmatprep.subr.mxu0 0.0
        %1007 = vmatpush1.msra.mxu0 %v507
        %1008 = vmatprep.subr.mxu0 0.0
        %1009 = vmatpush1.msra.mxu0 0.0
        %1010 = vmatprep.subr.mxu0 0.0
        %1011 = vmatpush1.msra.mxu0 0.0
        %1012 = vmatprep.subr.mxu0 0.0
        %1013 = vmatpush1.msra.mxu0 0.0
        %1014 = vmatprep.subr.mxu0 0.0
        %1015 = vmatpush1.msra.mxu0 0.0
        %1016 = vmatprep.subr.mxu0 0.0
        %1017 = vmatpush1.msra.mxu0 0.0
        %1018 = vmatprep.subr.mxu0 0.0
        %1019 = vmatpush1.msra.mxu0 0.0
        %1020 = vmatprep.subr.mxu0 0.0
        %1021 = vmatpush1.msra.mxu0 0.0
        %1022 = vmatprep.subr.mxu0 0.0
        %1023 = vmatpush1.msra.mxu0 0.0
        %1024 = vmatprep.subr.mxu0 0.0
        %1025 = vmatpush1.msra.mxu0 0.0
        %1026 = vmatprep.subr.mxu0 0.0
        %1027 = vmatpush1.msra.mxu0 0.0
        %1028 = vmatprep.subr.mxu0 0.0
        %1029 = vmatpush1.msra.mxu0 0.0
        %1030 = vmatprep.subr.mxu0 0.0
        %1031 = vmatpush1.msra.mxu0 0.0
        %1032 = vmatprep.subr.mxu0 0.0
        %1033 = vmatpush1.msra.mxu0 0.0
        %1034 = vmatprep.subr.mxu0 0.0
        %1035 = vmatpush1.msra.mxu0 0.0
        %1036 = vmatprep.subr.mxu0 0.0
        %1037 = vmatpush1.msra.mxu0 0.0
        %1038 = vmatprep.subr.mxu0 0.0
        %1039 = vmatpush1.msra.mxu0 0.0
        %1040 = vmatprep.mubr.f32.mxu0 0.0
        %1041 = vmatmul.mubr.f32.gmra.mrb[0].mxu0 %v971
        %v1042 = vpop.f32.mrb[0].mxu0
        %v1043 = vadd.f32 0.0, %v1042
        %v1044 = vpop.f32.mrb[0].mxu0
        %1045 = vdwg.mxu0
        %v1046 = vadd.f32 %v975, %v1043
        %v1047 = vtanh.pop %v1046
        %s1048 = scalar_lea.vmem [#allocation4], 8
        %1049 = vst [vmem:[%s1048] sm:$0x3] %v1047
        %s1050 = scalar_lea.vmem [#allocation3], 10
        %v1051 = vld [vmem:[%s1050] sm:$0x3]
        %1052 = vmatprep.subr.mxu0 0.0
        %1053 = vmatpush1.msra.mxu0 %v492
        %1054 = vmatprep.subr.mxu0 0.0
        %1055 = vmatpush1.msra.mxu0 %v493
        %1056 = vmatprep.subr.mxu0 0.0
        %1057 = vmatpush1.msra.mxu0 %v494
        %1058 = vmatprep.subr.mxu0 0.0
        %1059 = vmatpush1.msra.mxu0 %v495
        %1060 = vmatprep.subr.mxu0 0.0
        %1061 = vmatpush1.msra.mxu0 %v496
        %1062 = vmatprep.subr.mxu0 0.0
        %1063 = vmatpush1.msra.mxu0 %v497
        %1064 = vmatprep.subr.mxu0 0.0
        %1065 = vmatpush1.msra.mxu0 %v498
        %1066 = vmatprep.subr.mxu0 0.0
        %1067 = vmatpush1.msra.mxu0 %v499
        %1068 = vmatprep.subr.mxu0 0.0
        %1069 = vmatpush1.msra.mxu0 %v500
        %1070 = vmatprep.subr.mxu0 0.0
        %1071 = vmatpush1.msra.mxu0 %v501
        %1072 = vmatprep.subr.mxu0 0.0
        %1073 = vmatpush1.msra.mxu0 %v502
        %1074 = vmatprep.subr.mxu0 0.0
        %1075 = vmatpush1.msra.mxu0 %v503
        %1076 = vmatprep.subr.mxu0 0.0
        %1077 = vmatpush1.msra.mxu0 %v504
        %1078 = vmatprep.subr.mxu0 0.0
        %1079 = vmatpush1.msra.mxu0 %v505
        %1080 = vmatprep.subr.mxu0 0.0
        %1081 = vmatpush1.msra.mxu0 %v506
        %1082 = vmatprep.subr.mxu0 0.0
        %1083 = vmatpush1.msra.mxu0 %v507
        %1084 = vmatprep.subr.mxu0 0.0
        %1085 = vmatpush1.msra.mxu0 0.0
        %1086 = vmatprep.subr.mxu0 0.0
        %1087 = vmatpush1.msra.mxu0 0.0
        %1088 = vmatprep.subr.mxu0 0.0
        %1089 = vmatpush1.msra.mxu0 0.0
        %1090 = vmatprep.subr.mxu0 0.0
        %1091 = vmatpush1.msra.mxu0 0.0
        %1092 = vmatprep.subr.mxu0 0.0
        %1093 = vmatpush1.msra.mxu0 0.0
        %1094 = vmatprep.subr.mxu0 0.0
        %1095 = vmatpush1.msra.mxu0 0.0
        %1096 = vmatprep.subr.mxu0 0.0
        %1097 = vmatpush1.msra.mxu0 0.0
        %1098 = vmatprep.subr.mxu0 0.0
        %1099 = vmatpush1.msra.mxu0 0.0
        %1100 = vmatprep.subr.mxu0 0.0
        %1101 = vmatpush1.msra.mxu0 0.0
        %1102 = vmatprep.subr.mxu0 0.0
        %1103 = vmatpush1.msra.mxu0 0.0
        %1104 = vmatprep.subr.mxu0 0.0
        %1105 = vmatpush1.msra.mxu0 0.0
        %1106 = vmatprep.subr.mxu0 0.0
        %1107 = vmatpush1.msra.mxu0 0.0
        %1108 = vmatprep.subr.mxu0 0.0
        %1109 = vmatpush1.msra.mxu0 0.0
        %1110 = vmatprep.subr.mxu0 0.0
        %1111 = vmatpush1.msra.mxu0 0.0
        %1112 = vmatprep.subr.mxu0 0.0
        %1113 = vmatpush1.msra.mxu0 0.0
        %1114 = vmatprep.subr.mxu0 0.0
        %1115 = vmatpush1.msra.mxu0 0.0
        %1116 = vmatprep.mubr.f32.mxu0 0.0
        %1117 = vmatmul.mubr.f32.gmra.mrb[0].mxu0 %v1047
        %v1118 = vpop.f32.mrb[0].mxu0
        %v1119 = vadd.f32 0.0, %v1118
        %v1120 = vpop.f32.mrb[0].mxu0
        %1121 = vdwg.mxu0
        %v1122 = vadd.f32 %v1051, %v1119
        %v1123 = vtanh.pop %v1122
        %s1124 = scalar_lea.vmem [#allocation4], 10
        %1125 = vst [vmem:[%s1124] sm:$0x3] %v1123
        %s1126 = scalar_lea.vmem [#allocation3], 12
        %v1127 = vld [vmem:[%s1126] sm:$0x3]
        %1128 = vmatprep.subr.mxu0 0.0
        %1129 = vmatpush1.msra.mxu0 %v492
        %1130 = vmatprep.subr.mxu0 0.0
        %1131 = vmatpush1.msra.mxu0 %v493
        %1132 = vmatprep.subr.mxu0 0.0
        %1133 = vmatpush1.msra.mxu0 %v494
        %1134 = vmatprep.subr.mxu0 0.0
        %1135 = vmatpush1.msra.mxu0 %v495
        %1136 = vmatprep.subr.mxu0 0.0
        %1137 = vmatpush1.msra.mxu0 %v496
        %1138 = vmatprep.subr.mxu0 0.0
        %1139 = vmatpush1.msra.mxu0 %v497
        %1140 = vmatprep.subr.mxu0 0.0
        %1141 = vmatpush1.msra.mxu0 %v498
        %1142 = vmatprep.subr.mxu0 0.0
        %1143 = vmatpush1.msra.mxu0 %v499
        %1144 = vmatprep.subr.mxu0 0.0
        %1145 = vmatpush1.msra.mxu0 %v500
        %1146 = vmatprep.subr.mxu0 0.0
        %1147 = vmatpush1.msra.mxu0 %v501
        %1148 = vmatprep.subr.mxu0 0.0
        %1149 = vmatpush1.msra.mxu0 %v502
        %1150 = vmatprep.subr.mxu0 0.0
        %1151 = vmatpush1.msra.mxu0 %v503
        %1152 = vmatprep.subr.mxu0 0.0
        %1153 = vmatpush1.msra.mxu0 %v504
        %1154 = vmatprep.subr.mxu0 0.0
        %1155 = vmatpush1.msra.mxu0 %v505
        %1156 = vmatprep.subr.mxu0 0.0
        %1157 = vmatpush1.msra.mxu0 %v506
        %1158 = vmatprep.subr.mxu0 0.0
        %1159 = vmatpush1.msra.mxu0 %v507
        %1160 = vmatprep.subr.mxu0 0.0
        %1161 = vmatpush1.msra.mxu0 0.0
        %1162 = vmatprep.subr.mxu0 0.0
        %1163 = vmatpush1.msra.mxu0 0.0
        %1164 = vmatprep.subr.mxu0 0.0
        %1165 = vmatpush1.msra.mxu0 0.0
        %1166 = vmatprep.subr.mxu0 0.0
        %1167 = vmatpush1.msra.mxu0 0.0
        %1168 = vmatprep.subr.mxu0 0.0
        %1169 = vmatpush1.msra.mxu0 0.0
        %1170 = vmatprep.subr.mxu0 0.0
        %1171 = vmatpush1.msra.mxu0 0.0
        %1172 = vmatprep.subr.mxu0 0.0
        %1173 = vmatpush1.msra.mxu0 0.0
        %1174 = vmatprep.subr.mxu0 0.0
        %1175 = vmatpush1.msra.mxu0 0.0
        %1176 = vmatprep.subr.mxu0 0.0
        %1177 = vmatpush1.msra.mxu0 0.0
        %1178 = vmatprep.subr.mxu0 0.0
        %1179 = vmatpush1.msra.mxu0 0.0
        %1180 = vmatprep.subr.mxu0 0.0
        %1181 = vmatpush1.msra.mxu0 0.0
        %1182 = vmatprep.subr.mxu0 0.0
        %1183 = vmatpush1.msra.mxu0 0.0
        %1184 = vmatprep.subr.mxu0 0.0
        %1185 = vmatpush1.msra.mxu0 0.0
        %1186 = vmatprep.subr.mxu0 0.0
        %1187 = vmatpush1.msra.mxu0 0.0
        %1188 = vmatprep.subr.mxu0 0.0
        %1189 = vmatpush1.msra.mxu0 0.0
        %1190 = vmatprep.subr.mxu0 0.0
        %1191 = vmatpush1.msra.mxu0 0.0
        %1192 = vmatprep.mubr.f32.mxu0 0.0
        %1193 = vmatmul.mubr.f32.gmra.mrb[0].mxu0 %v1123
        %v1194 = vpop.f32.mrb[0].mxu0
        %v1195 = vadd.f32 0.0, %v1194
        %v1196 = vpop.f32.mrb[0].mxu0
        %1197 = vdwg.mxu0
        %v1198 = vadd.f32 %v1127, %v1195
        %v1199 = vtanh.pop %v1198
        %s1200 = scalar_lea.vmem [#allocation4], 12
        %1201 = vst [vmem:[%s1200] sm:$0x3] %v1199
        %s1202 = scalar_lea.vmem [#allocation3], 14
        %v1203 = vld [vmem:[%s1202] sm:$0x3]
        %1204 = vmatprep.subr.mxu0 0.0
        %1205 = vmatpush1.msra.mxu0 %v492
        %1206 = vmatprep.subr.mxu0 0.0
        %1207 = vmatpush1.msra.mxu0 %v493
        %1208 = vmatprep.subr.mxu0 0.0
        %1209 = vmatpush1.msra.mxu0 %v494
        %1210 = vmatprep.subr.mxu0 0.0
        %1211 = vmatpush1.msra.mxu0 %v495
        %1212 = vmatprep.subr.mxu0 0.0
        %1213 = vmatpush1.msra.mxu0 %v496
        %1214 = vmatprep.subr.mxu0 0.0
        %1215 = vmatpush1.msra.mxu0 %v497
        %1216 = vmatprep.subr.mxu0 0.0
        %1217 = vmatpush1.msra.mxu0 %v498
        %1218 = vmatprep.subr.mxu0 0.0
        %1219 = vmatpush1.msra.mxu0 %v499
        %1220 = vmatprep.subr.mxu0 0.0
        %1221 = vmatpush1.msra.mxu0 %v500
        %1222 = vmatprep.subr.mxu0 0.0
        %1223 = vmatpush1.msra.mxu0 %v501
        %1224 = vmatprep.subr.mxu0 0.0
        %1225 = vmatpush1.msra.mxu0 %v502
        %1226 = vmatprep.subr.mxu0 0.0
        %1227 = vmatpush1.msra.mxu0 %v503
        %1228 = vmatprep.subr.mxu0 0.0
        %1229 = vmatpush1.msra.mxu0 %v504
        %1230 = vmatprep.subr.mxu0 0.0
        %1231 = vmatpush1.msra.mxu0 %v505
        %1232 = vmatprep.subr.mxu0 0.0
        %1233 = vmatpush1.msra.mxu0 %v506
        %1234 = vmatprep.subr.mxu0 0.0
        %1235 = vmatpush1.msra.mxu0 %v507
        %1236 = vmatprep.subr.mxu0 0.0
        %1237 = vmatpush1.msra.mxu0 0.0
        %1238 = vmatprep.subr.mxu0 0.0
        %1239 = vmatpush1.msra.mxu0 0.0
        %1240 = vmatprep.subr.mxu0 0.0
        %1241 = vmatpush1.msra.mxu0 0.0
        %1242 = vmatprep.subr.mxu0 0.0
        %1243 = vmatpush1.msra.mxu0 0.0
        %1244 = vmatprep.subr.mxu0 0.0
        %1245 = vmatpush1.msra.mxu0 0.0
        %1246 = vmatprep.subr.mxu0 0.0
        %1247 = vmatpush1.msra.mxu0 0.0
        %1248 = vmatprep.subr.mxu0 0.0
        %1249 = vmatpush1.msra.mxu0 0.0
        %1250 = vmatprep.subr.mxu0 0.0
        %1251 = vmatpush1.msra.mxu0 0.0
        %1252 = vmatprep.subr.mxu0 0.0
        %1253 = vmatpush1.msra.mxu0 0.0
        %1254 = vmatprep.subr.mxu0 0.0
        %1255 = vmatpush1.msra.mxu0 0.0
        %1256 = vmatprep.subr.mxu0 0.0
        %1257 = vmatpush1.msra.mxu0 0.0
        %1258 = vmatprep.subr.mxu0 0.0
        %1259 = vmatpush1.msra.mxu0 0.0
        %1260 = vmatprep.subr.mxu0 0.0
        %1261 = vmatpush1.msra.mxu0 0.0
        %1262 = vmatprep.subr.mxu0 0.0
        %1263 = vmatpush1.msra.mxu0 0.0
        %1264 = vmatprep.subr.mxu0 0.0
        %1265 = vmatpush1.msra.mxu0 0.0
        %1266 = vmatprep.subr.mxu0 0.0
        %1267 = vmatpush1.msra.mxu0 0.0
        %1268 = vmatprep.mubr.f32.mxu0 0.0
        %1269 = vmatmul.mubr.f32.gmra.mrb[0].mxu0 %v1199
        %v1270 = vpop.f32.mrb[0].mxu0
        %v1271 = vadd.f32 0.0, %v1270
        %v1272 = vpop.f32.mrb[0].mxu0
        %1273 = vdwg.mxu0
        %v1274 = vadd.f32 %v1203, %v1271
        %v1275 = vtanh.pop %v1274
        %s1276 = scalar_lea.vmem [#allocation4], 14
        %1277 = vst [vmem:[%s1276] sm:$0x3] %v1275
        %1278 = vst [vmem:[#allocation2] sm:$0x3] %v1275
        %v1279 = vld [vmem:[#allocation4] sm:$0x3]
        %v1280 = vld [vmem:[#allocation4 + $0x2] sm:$0x3]
        %v1281 = vld [vmem:[#allocation4 + $0x4] sm:$0x3]
        %v1282 = vld [vmem:[#allocation4 + $0x6] sm:$0x3]
        %v1283 = vld [vmem:[#allocation4 + $0x8] sm:$0x3]
        %v1284 = vld [vmem:[#allocation4 + $0xa] sm:$0x3]
        %v1285 = vld [vmem:[#allocation4 + $0xc] sm:$0x3]
        %v1286 = vld [vmem:[#allocation4 + $0xe] sm:$0x3]
        %v1287 = vld [vmem:[#allocation11] sm:$0xff]
        %v1288 = vld [vmem:[#allocation11 + $0x8] sm:$0xff]
        %v1289 = vld [vmem:[#allocation11 + $0x10] sm:$0xff]
        %v1290 = vld [vmem:[#allocation11 + $0x18] sm:$0xff]
        %v1291 = vld [vmem:[#allocation11 + $0x20] sm:$0xff]
        %v1292 = vld [vmem:[#allocation11 + $0x28] sm:$0xff]
        %v1293 = vld [vmem:[#allocation11 + $0x30] sm:$0xff]
        %v1294 = vld [vmem:[#allocation11 + $0x38] sm:$0xff]
        %v1295 = vld [vmem:[#allocation11 + $0x40] sm:$0xff]
        %v1296 = vld [vmem:[#allocation11 + $0x48] sm:$0xff]
        %v1297 = vld [vmem:[#allocation11 + $0x50] sm:$0xff]
        %v1298 = vld [vmem:[#allocation11 + $0x58] sm:$0xff]
        %v1299 = vld [vmem:[#allocation11 + $0x60] sm:$0xff]
        %v1300 = vld [vmem:[#allocation11 + $0x68] sm:$0xff]
        %v1301 = vld [vmem:[#allocation11 + $0x70] sm:$0xff]
        %v1302 = vld [vmem:[#allocation11 + $0x78] sm:$0xff]
        %v1303 = vld [vmem:[#allocation13] sm:$0xff]
        %v1304 = vld [vmem:[#allocation13 + $0x8] sm:$0xff]
        %v1305 = vld [vmem:[#allocation13 + $0x10] sm:$0xff]
        %v1306 = vld [vmem:[#allocation13 + $0x18] sm:$0xff]
        %v1307 = vld [vmem:[#allocation13 + $0x20] sm:$0xff]
        %v1308 = vld [vmem:[#allocation13 + $0x28] sm:$0xff]
        %v1309 = vld [vmem:[#allocation13 + $0x30] sm:$0xff]
        %v1310 = vld [vmem:[#allocation13 + $0x38] sm:$0xff]
        %v1311 = vld [vmem:[#allocation13 + $0x40] sm:$0xff]
        %v1312 = vld [vmem:[#allocation13 + $0x48] sm:$0xff]
        %v1313 = vld [vmem:[#allocation13 + $0x50] sm:$0xff]
        %v1314 = vld [vmem:[#allocation13 + $0x58] sm:$0xff]
        %v1315 = vld [vmem:[#allocation13 + $0x60] sm:$0xff]
        %v1316 = vld [vmem:[#allocation13 + $0x68] sm:$0xff]
        %v1317 = vld [vmem:[#allocation13 + $0x70] sm:$0xff]
        %v1318 = vld [vmem:[#allocation13 + $0x78] sm:$0xff]
        %v1319 = vld [vmem:[%s7] sm:$0x1]
        %v1321 = vlaneseq
        %v1322 = vshrl.u32 %v1321, 7
        %v1323 = vsub.s32 0, %v1322
        %v1324 = vrot.slane %v1319, %v1323
        %v1334 = vcombine.low %v1279, %v1280
        %v1335 = vcombine.low %v1281, %v1282
        %v1337 = vunpack.c.l.s4 1983009808
        %v1338 = vunpack.c.0.s8 %v1337
        %v1339 = vlaneseq
        %v1340 = vshrl.u32 %v1339, 7
        %v1341 = vsub.s32 %v1338, %v1340
        %v1342 = vrot.slane %v1334, %v1341
        %v1344 = vunpack.c.l.s4 1983009808
        %v1345 = vunpack.c.0.s8 %v1344
        %v1346 = vlaneseq
        %v1347 = vshrl.u32 %v1346, 7
        %v1348 = vsub.s32 %v1345, %v1347
        %v1349 = vrot.slane %v1335, %v1348
        %v1350 = vcombine.low %v1342, %v1349
        %v1351 = vcombine.low %v1283, %v1284
        %v1352 = vcombine.low %v1285, %v1286
        %v1354 = vunpack.c.l.s4 1983009808
        %v1355 = vunpack.c.0.s8 %v1354
        %v1356 = vlaneseq
        %v1357 = vshrl.u32 %v1356, 7
        %v1358 = vsub.s32 %v1355, %v1357
        %v1359 = vrot.slane %v1351, %v1358
        %v1361 = vunpack.c.l.s4 1983009808
        %v1362 = vunpack.c.0.s8 %v1361
        %v1363 = vlaneseq
        %v1364 = vshrl.u32 %v1363, 7
        %v1365 = vsub.s32 %v1362, %v1364
        %v1366 = vrot.slane %v1352, %v1365
        %v1367 = vcombine.low %v1359, %v1366
        %1370 = vmatprep.subr.mxu0 0.0
        %1371 = vmatpush1.msra.mxu0 %v1287
        %1372 = vmatprep.subr.mxu0 0.0
        %1373 = vmatpush1.msra.mxu0 %v1288
        %1374 = vmatprep.subr.mxu0 0.0
        %1375 = vmatpush1.msra.mxu0 %v1289
        %1376 = vmatprep.subr.mxu0 0.0
        %1377 = vmatpush1.msra.mxu0 %v1290
        %1378 = vmatprep.subr.mxu0 0.0
        %1379 = vmatpush1.msra.mxu0 %v1291
        %1380 = vmatprep.subr.mxu0 0.0
        %1381 = vmatpush1.msra.mxu0 %v1292
        %1382 = vmatprep.subr.mxu0 0.0
        %1383 = vmatpush1.msra.mxu0 %v1293
        %1384 = vmatprep.subr.mxu0 0.0
        %1385 = vmatpush1.msra.mxu0 %v1294
        %1386 = vmatprep.subr.mxu0 0.0
        %1387 = vmatpush1.msra.mxu0 %v1295
        %1388 = vmatprep.subr.mxu0 0.0
        %1389 = vmatpush1.msra.mxu0 %v1296
        %1390 = vmatprep.subr.mxu0 0.0
        %1391 = vmatpush1.msra.mxu0 %v1297
        %1392 = vmatprep.subr.mxu0 0.0
        %1393 = vmatpush1.msra.mxu0 %v1298
        %1394 = vmatprep.subr.mxu0 0.0
        %1395 = vmatpush1.msra.mxu0 %v1299
        %1396 = vmatprep.subr.mxu0 0.0
        %1397 = vmatpush1.msra.mxu0 %v1300
        %1398 = vmatprep.subr.mxu0 0.0
        %1399 = vmatpush1.msra.mxu0 %v1301
        %1400 = vmatprep.subr.mxu0 0.0
        %1401 = vmatpush1.msra.mxu0 %v1302
        %1402 = vmatprep.subr.mxu0 0.0
        %1403 = vmatpush1.msra.mxu0 0.0
        %1404 = vmatprep.subr.mxu0 0.0
        %1405 = vmatpush1.msra.mxu0 0.0
        %1406 = vmatprep.subr.mxu0 0.0
        %1407 = vmatpush1.msra.mxu0 0.0
        %1408 = vmatprep.subr.mxu0 0.0
        %1409 = vmatpush1.msra.mxu0 0.0
        %1410 = vmatprep.subr.mxu0 0.0
        %1411 = vmatpush1.msra.mxu0 0.0
        %1412 = vmatprep.subr.mxu0 0.0
        %1413 = vmatpush1.msra.mxu0 0.0
        %1414 = vmatprep.subr.mxu0 0.0
        %1415 = vmatpush1.msra.mxu0 0.0
        %1416 = vmatprep.subr.mxu0 0.0
        %1417 = vmatpush1.msra.mxu0 0.0
        %1418 = vmatprep.subr.mxu0 0.0
        %1419 = vmatpush1.msra.mxu0 0.0
        %1420 = vmatprep.subr.mxu0 0.0
        %1421 = vmatpush1.msra.mxu0 0.0
        %1422 = vmatprep.subr.mxu0 0.0
        %1423 = vmatpush1.msra.mxu0 0.0
        %1424 = vmatprep.subr.mxu0 0.0
        %1425 = vmatpush1.msra.mxu0 0.0
        %1426 = vmatprep.subr.mxu0 0.0
        %1427 = vmatpush1.msra.mxu0 0.0
        %1428 = vmatprep.subr.mxu0 0.0
        %1429 = vmatpush1.msra.mxu0 0.0
        %1430 = vmatprep.subr.mxu0 0.0
        %1431 = vmatpush1.msra.mxu0 0.0
        %1432 = vmatprep.subr.mxu0 0.0
        %1433 = vmatpush1.msra.mxu0 0.0
        %1434 = vmatprep.mubr.f32.mxu0 0.0
        %1435 = vmatmul.mubr.f32.gmra.mrb[0].mxu0 %v1350
        %v1436 = vpop.f32.mrb[0].mxu0
        %v1437 = vadd.f32 %v1324, %v1436
        %v1438 = vpop.f32.mrb[0].mxu0
        %1439 = vmatprep.mubr.f32.mxu0 0.0
        %1440 = vmatmul.mubr.f32.gmra.mrb[0].mxu0 %v1367
        %v1441 = vpop.f32.mrb[0].mxu0
        %v1442 = vadd.f32 %v1324, %v1441
        %v1443 = vpop.f32.mrb[0].mxu0
        %1444 = vdwg.mxu0
        %v1447 = vcombine.high %v1437, %v1437
        %v1449 = vunpack.c.l.s4 1983009808
        %v1450 = vunpack.c.0.s8 %v1449
        %v1451 = vlaneseq
        %v1452 = vshrl.u32 %v1451, 7
        %v1453 = vsub.s32 %v1450, %v1452
        %v1454 = vrot.slane %v1437, %v1453
        %v1456 = vunpack.c.l.s4 1983009808
        %v1457 = vunpack.c.0.s8 %v1456
        %v1458 = vlaneseq
        %v1459 = vshrl.u32 %v1458, 7
        %v1460 = vsub.s32 %v1457, %v1459
        %v1461 = vrot.slane %v1447, %v1460
        %v1462 = vcombine.high %v1454, %v1454
        %v1463 = vcombine.high %v1461, %v1461
        %v1464 = vcombine.high %v1442, %v1442
        %v1466 = vunpack.c.l.s4 1983009808
        %v1467 = vunpack.c.0.s8 %v1466
        %v1468 = vlaneseq
        %v1469 = vshrl.u32 %v1468, 7
        %v1470 = vsub.s32 %v1467, %v1469
        %v1471 = vrot.slane %v1442, %v1470
        %v1473 = vunpack.c.l.s4 1983009808
        %v1474 = vunpack.c.0.s8 %v1473
        %v1475 = vlaneseq
        %v1476 = vshrl.u32 %v1475, 7
        %v1477 = vsub.s32 %v1474, %v1476
        %v1478 = vrot.slane %v1464, %v1477
        %v1479 = vcombine.high %v1471, %v1471
        %v1480 = vcombine.high %v1478, %v1478
        %1489 = vst [vmem:[#allocation3] sm:$0x3] %v1454
        %1490 = vst [vmem:[#allocation3 + $0x2] sm:$0x3] %v1462
        %1491 = vst [vmem:[#allocation3 + $0x4] sm:$0x3] %v1461
        %1492 = vst [vmem:[#allocation3 + $0x6] sm:$0x3] %v1463
        %1493 = vst [vmem:[#allocation3 + $0x8] sm:$0x3] %v1471
        %1494 = vst [vmem:[#allocation3 + $0xa] sm:$0x3] %v1479
        %1495 = vst [vmem:[#allocation3 + $0xc] sm:$0x3] %v1478
        %1496 = vst [vmem:[#allocation3 + $0xe] sm:$0x3] %v1480
        %s1497 = scalar_lea.vmem [#allocation2], 2
        %v1498 = vld [vmem:[%s1497] sm:$0x3]
        %v1499 = vld [vmem:[#allocation3] sm:$0x3]
        %1500 = vmatprep.subr.mxu0 0.0
        %1501 = vmatpush1.msra.mxu0 %v1303
        %1502 = vmatprep.subr.mxu0 0.0
        %1503 = vmatpush1.msra.mxu0 %v1304
        %1504 = vmatprep.subr.mxu0 0.0
        %1505 = vmatpush1.msra.mxu0 %v1305
        %1506 = vmatprep.subr.mxu0 0.0
        %1507 = vmatpush1.msra.mxu0 %v1306
        %1508 = vmatprep.subr.mxu0 0.0
        %1509 = vmatpush1.msra.mxu0 %v1307
        %1510 = vmatprep.subr.mxu0 0.0
        %1511 = vmatpush1.msra.mxu0 %v1308
        %1512 = vmatprep.subr.mxu0 0.0
        %1513 = vmatpush1.msra.mxu0 %v1309
        %1514 = vmatprep.subr.mxu0 0.0
        %1515 = vmatpush1.msra.mxu0 %v1310
        %1516 = vmatprep.subr.mxu0 0.0
        %1517 = vmatpush1.msra.mxu0 %v1311
        %1518 = vmatprep.subr.mxu0 0.0
        %1519 = vmatpush1.msra.mxu0 %v1312
        %1520 = vmatprep.subr.mxu0 0.0
        %1521 = vmatpush1.msra.mxu0 %v1313
        %1522 = vmatprep.subr.mxu0 0.0
        %1523 = vmatpush1.msra.mxu0 %v1314
        %1524 = vmatprep.subr.mxu0 0.0
        %1525 = vmatpush1.msra.mxu0 %v1315
        %1526 = vmatprep.subr.mxu0 0.0
        %1527 = vmatpush1.msra.mxu0 %v1316
        %1528 = vmatprep.subr.mxu0 0.0
        %1529 = vmatpush1.msra.mxu0 %v1317
        %1530 = vmatprep.subr.mxu0 0.0
        %1531 = vmatpush1.msra.mxu0 %v1318
        %1532 = vmatprep.subr.mxu0 0.0
        %1533 = vmatpush1.msra.mxu0 0.0
        %1534 = vmatprep.subr.mxu0 0.0
        %1535 = vmatpush1.msra.mxu0 0.0
        %1536 = vmatprep.subr.mxu0 0.0
        %1537 = vmatpush1.msra.mxu0 0.0
        %1538 = vmatprep.subr.mxu0 0.0
        %1539 = vmatpush1.msra.mxu0 0.0
        %1540 = vmatprep.subr.mxu0 0.0
        %1541 = vmatpush1.msra.mxu0 0.0
        %1542 = vmatprep.subr.mxu0 0.0
        %1543 = vmatpush1.msra.mxu0 0.0
        %1544 = vmatprep.subr.mxu0 0.0
        %1545 = vmatpush1.msra.mxu0 0.0
        %1546 = vmatprep.subr.mxu0 0.0
        %1547 = vmatpush1.msra.mxu0 0.0
        %1548 = vmatprep.subr.mxu0 0.0
        %1549 = vmatpush1.msra.mxu0 0.0
        %1550 = vmatprep.subr.mxu0 0.0
        %1551 = vmatpush1.msra.mxu0 0.0
        %1552 = vmatprep.subr.mxu0 0.0
        %1553 = vmatpush1.msra.mxu0 0.0
        %1554 = vmatprep.subr.mxu0 0.0
        %1555 = vmatpush1.msra.mxu0 0.0
        %1556 = vmatprep.subr.mxu0 0.0
        %1557 = vmatpush1.msra.mxu0 0.0
        %1558 = vmatprep.subr.mxu0 0.0
        %1559 = vmatpush1.msra.mxu0 0.0
        %1560 = vmatprep.subr.mxu0 0.0
        %1561 = vmatpush1.msra.mxu0 0.0
        %1562 = vmatprep.subr.mxu0 0.0
        %1563 = vmatpush1.msra.mxu0 0.0
        %1564 = vmatprep.mubr.f32.mxu0 0.0
        %1565 = vmatmul.mubr.f32.gmra.mrb[0].mxu0 %v1498
        %v1566 = vpop.f32.mrb[0].mxu0
        %v1567 = vadd.f32 0.0, %v1566
        %v1568 = vpop.f32.mrb[0].mxu0
        %1569 = vdwg.mxu0
        %v1570 = vadd.f32 %v1499, %v1567
        %v1571 = vtanh.pop %v1570
        %v1572 = vld [vmem:[%s746] sm:$0x3]
        %1573 = vmatprep.subr.mxu0 0.0
        %1574 = vmatpush1.msra.mxu0 %v1303
        %1575 = vmatprep.subr.mxu0 0.0
        %1576 = vmatpush1.msra.mxu0 %v1304
        %1577 = vmatprep.subr.mxu0 0.0
        %1578 = vmatpush1.msra.mxu0 %v1305
        %1579 = vmatprep.subr.mxu0 0.0
        %1580 = vmatpush1.msra.mxu0 %v1306
        %1581 = vmatprep.subr.mxu0 0.0
        %1582 = vmatpush1.msra.mxu0 %v1307
        %1583 = vmatprep.subr.mxu0 0.0
        %1584 = vmatpush1.msra.mxu0 %v1308
        %1585 = vmatprep.subr.mxu0 0.0
        %1586 = vmatpush1.msra.mxu0 %v1309
        %1587 = vmatprep.subr.mxu0 0.0
        %1588 = vmatpush1.msra.mxu0 %v1310
        %1589 = vmatprep.subr.mxu0 0.0
        %1590 = vmatpush1.msra.mxu0 %v1311
        %1591 = vmatprep.subr.mxu0 0.0
        %1592 = vmatpush1.msra.mxu0 %v1312
        %1593 = vmatprep.subr.mxu0 0.0
        %1594 = vmatpush1.msra.mxu0 %v1313
        %1595 = vmatprep.subr.mxu0 0.0
        %1596 = vmatpush1.msra.mxu0 %v1314
        %1597 = vmatprep.subr.mxu0 0.0
        %1598 = vmatpush1.msra.mxu0 %v1315
        %1599 = vmatprep.subr.mxu0 0.0
        %1600 = vmatpush1.msra.mxu0 %v1316
        %1601 = vmatprep.subr.mxu0 0.0
        %1602 = vmatpush1.msra.mxu0 %v1317
        %1603 = vmatprep.subr.mxu0 0.0
        %1604 = vmatpush1.msra.mxu0 %v1318
        %1605 = vmatprep.subr.mxu0 0.0
        %1606 = vmatpush1.msra.mxu0 0.0
        %1607 = vmatprep.subr.mxu0 0.0
        %1608 = vmatpush1.msra.mxu0 0.0
        %1609 = vmatprep.subr.mxu0 0.0
        %1610 = vmatpush1.msra.mxu0 0.0
        %1611 = vmatprep.subr.mxu0 0.0
        %1612 = vmatpush1.msra.mxu0 0.0
        %1613 = vmatprep.subr.mxu0 0.0
        %1614 = vmatpush1.msra.mxu0 0.0
        %1615 = vmatprep.subr.mxu0 0.0
        %1616 = vmatpush1.msra.mxu0 0.0
        %1617 = vmatprep.subr.mxu0 0.0
        %1618 = vmatpush1.msra.mxu0 0.0
        %1619 = vmatprep.subr.mxu0 0.0
        %1620 = vmatpush1.msra.mxu0 0.0
        %1621 = vmatprep.subr.mxu0 0.0
        %1622 = vmatpush1.msra.mxu0 0.0
        %1623 = vmatprep.subr.mxu0 0.0
        %1624 = vmatpush1.msra.mxu0 0.0
        %1625 = vmatprep.subr.mxu0 0.0
        %1626 = vmatpush1.msra.mxu0 0.0
        %1627 = vmatprep.subr.mxu0 0.0
        %1628 = vmatpush1.msra.mxu0 0.0
        %1629 = vmatprep.subr.mxu0 0.0
        %1630 = vmatpush1.msra.mxu0 0.0
        %1631 = vmatprep.subr.mxu0 0.0
        %1632 = vmatpush1.msra.mxu0 0.0
        %1633 = vmatprep.subr.mxu0 0.0
        %1634 = vmatpush1.msra.mxu0 0.0
        %1635 = vmatprep.subr.mxu0 0.0
        %1636 = vmatpush1.msra.mxu0 0.0
        %1637 = vmatprep.mubr.f32.mxu0 0.0
        %1638 = vmatmul.mubr.f32.gmra.mrb[0].mxu0 %v1571
        %v1639 = vpop.f32.mrb[0].mxu0
        %v1640 = vadd.f32 0.0, %v1639
        %v1641 = vpop.f32.mrb[0].mxu0
        %1642 = vdwg.mxu0
        %v1643 = vadd.f32 %v1572, %v1640
        %v1644 = vtanh.pop %v1643
        %v1645 = vld [vmem:[%s822] sm:$0x3]
        %1646 = vmatprep.subr.mxu0 0.0
        %1647 = vmatpush1.msra.mxu0 %v1303
        %1648 = vmatprep.subr.mxu0 0.0
        %1649 = vmatpush1.msra.mxu0 %v1304
        %1650 = vmatprep.subr.mxu0 0.0
        %1651 = vmatpush1.msra.mxu0 %v1305
        %1652 = vmatprep.subr.mxu0 0.0
        %1653 = vmatpush1.msra.mxu0 %v1306
        %1654 = vmatprep.subr.mxu0 0.0
        %1655 = vmatpush1.msra.mxu0 %v1307
        %1656 = vmatprep.subr.mxu0 0.0
        %1657 = vmatpush1.msra.mxu0 %v1308
        %1658 = vmatprep.subr.mxu0 0.0
        %1659 = vmatpush1.msra.mxu0 %v1309
        %1660 = vmatprep.subr.mxu0 0.0
        %1661 = vmatpush1.msra.mxu0 %v1310
        %1662 = vmatprep.subr.mxu0 0.0
        %1663 = vmatpush1.msra.mxu0 %v1311
        %1664 = vmatprep.subr.mxu0 0.0
        %1665 = vmatpush1.msra.mxu0 %v1312
        %1666 = vmatprep.subr.mxu0 0.0
        %1667 = vmatpush1.msra.mxu0 %v1313
        %1668 = vmatprep.subr.mxu0 0.0
        %1669 = vmatpush1.msra.mxu0 %v1314
        %1670 = vmatprep.subr.mxu0 0.0
        %1671 = vmatpush1.msra.mxu0 %v1315
        %1672 = vmatprep.subr.mxu0 0.0
        %1673 = vmatpush1.msra.mxu0 %v1316
        %1674 = vmatprep.subr.mxu0 0.0
        %1675 = vmatpush1.msra.mxu0 %v1317
        %1676 = vmatprep.subr.mxu0 0.0
        %1677 = vmatpush1.msra.mxu0 %v1318
        %1678 = vmatprep.subr.mxu0 0.0
        %1679 = vmatpush1.msra.mxu0 0.0
        %1680 = vmatprep.subr.mxu0 0.0
        %1681 = vmatpush1.msra.mxu0 0.0
        %1682 = vmatprep.subr.mxu0 0.0
        %1683 = vmatpush1.msra.mxu0 0.0
        %1684 = vmatprep.subr.mxu0 0.0
        %1685 = vmatpush1.msra.mxu0 0.0
        %1686 = vmatprep.subr.mxu0 0.0
        %1687 = vmatpush1.msra.mxu0 0.0
        %1688 = vmatprep.subr.mxu0 0.0
        %1689 = vmatpush1.msra.mxu0 0.0
        %1690 = vmatprep.subr.mxu0 0.0
        %1691 = vmatpush1.msra.mxu0 0.0
        %1692 = vmatprep.subr.mxu0 0.0
        %1693 = vmatpush1.msra.mxu0 0.0
        %1694 = vmatprep.subr.mxu0 0.0
        %1695 = vmatpush1.msra.mxu0 0.0
        %1696 = vmatprep.subr.mxu0 0.0
        %1697 = vmatpush1.msra.mxu0 0.0
        %1698 = vmatprep.subr.mxu0 0.0
        %1699 = vmatpush1.msra.mxu0 0.0
        %1700 = vmatprep.subr.mxu0 0.0
        %1701 = vmatpush1.msra.mxu0 0.0
        %1702 = vmatprep.subr.mxu0 0.0
        %1703 = vmatpush1.msra.mxu0 0.0
        %1704 = vmatprep.subr.mxu0 0.0
        %1705 = vmatpush1.msra.mxu0 0.0
        %1706 = vmatprep.subr.mxu0 0.0
        %1707 = vmatpush1.msra.mxu0 0.0
        %1708 = vmatprep.subr.mxu0 0.0
        %1709 = vmatpush1.msra.mxu0 0.0
        %1710 = vmatprep.mubr.f32.mxu0 0.0
        %1711 = vmatmul.mubr.f32.gmra.mrb[0].mxu0 %v1644
        %v1712 = vpop.f32.mrb[0].mxu0
        %v1713 = vadd.f32 0.0, %v1712
        %v1714 = vpop.f32.mrb[0].mxu0
        %1715 = vdwg.mxu0
        %v1716 = vadd.f32 %v1645, %v1713
        %v1717 = vtanh.pop %v1716
        %v1718 = vld [vmem:[%s898] sm:$0x3]
        %1719 = vmatprep.subr.mxu0 0.0
        %1720 = vmatpush1.msra.mxu0 %v1303
        %1721 = vmatprep.subr.mxu0 0.0
        %1722 = vmatpush1.msra.mxu0 %v1304
        %1723 = vmatprep.subr.mxu0 0.0
        %1724 = vmatpush1.msra.mxu0 %v1305
        %1725 = vmatprep.subr.mxu0 0.0
        %1726 = vmatpush1.msra.mxu0 %v1306
        %1727 = vmatprep.subr.mxu0 0.0
        %1728 = vmatpush1.msra.mxu0 %v1307
        %1729 = vmatprep.subr.mxu0 0.0
        %1730 = vmatpush1.msra.mxu0 %v1308
        %1731 = vmatprep.subr.mxu0 0.0
        %1732 = vmatpush1.msra.mxu0 %v1309
        %1733 = vmatprep.subr.mxu0 0.0
        %1734 = vmatpush1.msra.mxu0 %v1310
        %1735 = vmatprep.subr.mxu0 0.0
        %1736 = vmatpush1.msra.mxu0 %v1311
        %1737 = vmatprep.subr.mxu0 0.0
        %1738 = vmatpush1.msra.mxu0 %v1312
        %1739 = vmatprep.subr.mxu0 0.0
        %1740 = vmatpush1.msra.mxu0 %v1313
        %1741 = vmatprep.subr.mxu0 0.0
        %1742 = vmatpush1.msra.mxu0 %v1314
        %1743 = vmatprep.subr.mxu0 0.0
        %1744 = vmatpush1.msra.mxu0 %v1315
        %1745 = vmatprep.subr.mxu0 0.0
        %1746 = vmatpush1.msra.mxu0 %v1316
        %1747 = vmatprep.subr.mxu0 0.0
        %1748 = vmatpush1.msra.mxu0 %v1317
        %1749 = vmatprep.subr.mxu0 0.0
        %1750 = vmatpush1.msra.mxu0 %v1318
        %1751 = vmatprep.subr.mxu0 0.0
        %1752 = vmatpush1.msra.mxu0 0.0
        %1753 = vmatprep.subr.mxu0 0.0
        %1754 = vmatpush1.msra.mxu0 0.0
        %1755 = vmatprep.subr.mxu0 0.0
        %1756 = vmatpush1.msra.mxu0 0.0
        %1757 = vmatprep.subr.mxu0 0.0
        %1758 = vmatpush1.msra.mxu0 0.0
        %1759 = vmatprep.subr.mxu0 0.0
        %1760 = vmatpush1.msra.mxu0 0.0
        %1761 = vmatprep.subr.mxu0 0.0
        %1762 = vmatpush1.msra.mxu0 0.0
        %1763 = vmatprep.subr.mxu0 0.0
        %1764 = vmatpush1.msra.mxu0 0.0
        %1765 = vmatprep.subr.mxu0 0.0
        %1766 = vmatpush1.msra.mxu0 0.0
        %1767 = vmatprep.subr.mxu0 0.0
        %1768 = vmatpush1.msra.mxu0 0.0
        %1769 = vmatprep.subr.mxu0 0.0
        %1770 = vmatpush1.msra.mxu0 0.0
        %1771 = vmatprep.subr.mxu0 0.0
        %1772 = vmatpush1.msra.mxu0 0.0
        %1773 = vmatprep.subr.mxu0 0.0
        %1774 = vmatpush1.msra.mxu0 0.0
        %1775 = vmatprep.subr.mxu0 0.0
        %1776 = vmatpush1.msra.mxu0 0.0
        %1777 = vmatprep.subr.mxu0 0.0
        %1778 = vmatpush1.msra.mxu0 0.0
        %1779 = vmatprep.subr.mxu0 0.0
        %1780 = vmatpush1.msra.mxu0 0.0
        %1781 = vmatprep.subr.mxu0 0.0
        %1782 = vmatpush1.msra.mxu0 0.0
        %1783 = vmatprep.mubr.f32.mxu0 0.0
        %1784 = vmatmul.mubr.f32.gmra.mrb[0].mxu0 %v1717
        %v1785 = vpop.f32.mrb[0].mxu0
        %v1786 = vadd.f32 0.0, %v1785
        %v1787 = vpop.f32.mrb[0].mxu0
        %1788 = vdwg.mxu0
        %v1789 = vadd.f32 %v1718, %v1786
        %v1790 = vtanh.pop %v1789
        %v1791 = vld [vmem:[%s974] sm:$0x3]
        %1792 = vmatprep.subr.mxu0 0.0
        %1793 = vmatpush1.msra.mxu0 %v1303
        %1794 = vmatprep.subr.mxu0 0.0
        %1795 = vmatpush1.msra.mxu0 %v1304
        %1796 = vmatprep.subr.mxu0 0.0
        %1797 = vmatpush1.msra.mxu0 %v1305
        %1798 = vmatprep.subr.mxu0 0.0
        %1799 = vmatpush1.msra.mxu0 %v1306
        %1800 = vmatprep.subr.mxu0 0.0
        %1801 = vmatpush1.msra.mxu0 %v1307
        %1802 = vmatprep.subr.mxu0 0.0
        %1803 = vmatpush1.msra.mxu0 %v1308
        %1804 = vmatprep.subr.mxu0 0.0
        %1805 = vmatpush1.msra.mxu0 %v1309
        %1806 = vmatprep.subr.mxu0 0.0
        %1807 = vmatpush1.msra.mxu0 %v1310
        %1808 = vmatprep.subr.mxu0 0.0
        %1809 = vmatpush1.msra.mxu0 %v1311
        %1810 = vmatprep.subr.mxu0 0.0
        %1811 = vmatpush1.msra.mxu0 %v1312
        %1812 = vmatprep.subr.mxu0 0.0
        %1813 = vmatpush1.msra.mxu0 %v1313
        %1814 = vmatprep.subr.mxu0 0.0
        %1815 = vmatpush1.msra.mxu0 %v1314
        %1816 = vmatprep.subr.mxu0 0.0
        %1817 = vmatpush1.msra.mxu0 %v1315
        %1818 = vmatprep.subr.mxu0 0.0
        %1819 = vmatpush1.msra.mxu0 %v1316
        %1820 = vmatprep.subr.mxu0 0.0
        %1821 = vmatpush1.msra.mxu0 %v1317
        %1822 = vmatprep.subr.mxu0 0.0
        %1823 = vmatpush1.msra.mxu0 %v1318
        %1824 = vmatprep.subr.mxu0 0.0
        %1825 = vmatpush1.msra.mxu0 0.0
        %1826 = vmatprep.subr.mxu0 0.0
        %1827 = vmatpush1.msra.mxu0 0.0
        %1828 = vmatprep.subr.mxu0 0.0
        %1829 = vmatpush1.msra.mxu0 0.0
        %1830 = vmatprep.subr.mxu0 0.0
        %1831 = vmatpush1.msra.mxu0 0.0
        %1832 = vmatprep.subr.mxu0 0.0
        %1833 = vmatpush1.msra.mxu0 0.0
        %1834 = vmatprep.subr.mxu0 0.0
        %1835 = vmatpush1.msra.mxu0 0.0
        %1836 = vmatprep.subr.mxu0 0.0
        %1837 = vmatpush1.msra.mxu0 0.0
        %1838 = vmatprep.subr.mxu0 0.0
        %1839 = vmatpush1.msra.mxu0 0.0
        %1840 = vmatprep.subr.mxu0 0.0
        %1841 = vmatpush1.msra.mxu0 0.0
        %1842 = vmatprep.subr.mxu0 0.0
        %1843 = vmatpush1.msra.mxu0 0.0
        %1844 = vmatprep.subr.mxu0 0.0
        %1845 = vmatpush1.msra.mxu0 0.0
        %1846 = vmatprep.subr.mxu0 0.0
        %1847 = vmatpush1.msra.mxu0 0.0
        %1848 = vmatprep.subr.mxu0 0.0
        %1849 = vmatpush1.msra.mxu0 0.0
        %1850 = vmatprep.subr.mxu0 0.0
        %1851 = vmatpush1.msra.mxu0 0.0
        %1852 = vmatprep.subr.mxu0 0.0
        %1853 = vmatpush1.msra.mxu0 0.0
        %1854 = vmatprep.subr.mxu0 0.0
        %1855 = vmatpush1.msra.mxu0 0.0
        %1856 = vmatprep.mubr.f32.mxu0 0.0
        %1857 = vmatmul.mubr.f32.gmra.mrb[0].mxu0 %v1790
        %v1858 = vpop.f32.mrb[0].mxu0
        %v1859 = vadd.f32 0.0, %v1858
        %v1860 = vpop.f32.mrb[0].mxu0
        %1861 = vdwg.mxu0
        %v1862 = vadd.f32 %v1791, %v1859
        %v1863 = vtanh.pop %v1862
        %v1864 = vld [vmem:[%s1050] sm:$0x3]
        %1865 = vmatprep.subr.mxu0 0.0
        %1866 = vmatpush1.msra.mxu0 %v1303
        %1867 = vmatprep.subr.mxu0 0.0
        %1868 = vmatpush1.msra.mxu0 %v1304
        %1869 = vmatprep.subr.mxu0 0.0
        %1870 = vmatpush1.msra.mxu0 %v1305
        %1871 = vmatprep.subr.mxu0 0.0
        %1872 = vmatpush1.msra.mxu0 %v1306
        %1873 = vmatprep.subr.mxu0 0.0
        %1874 = vmatpush1.msra.mxu0 %v1307
        %1875 = vmatprep.subr.mxu0 0.0
        %1876 = vmatpush1.msra.mxu0 %v1308
        %1877 = vmatprep.subr.mxu0 0.0
        %1878 = vmatpush1.msra.mxu0 %v1309
        %1879 = vmatprep.subr.mxu0 0.0
        %1880 = vmatpush1.msra.mxu0 %v1310
        %1881 = vmatprep.subr.mxu0 0.0
        %1882 = vmatpush1.msra.mxu0 %v1311
        %1883 = vmatprep.subr.mxu0 0.0
        %1884 = vmatpush1.msra.mxu0 %v1312
        %1885 = vmatprep.subr.mxu0 0.0
        %1886 = vmatpush1.msra.mxu0 %v1313
        %1887 = vmatprep.subr.mxu0 0.0
        %1888 = vmatpush1.msra.mxu0 %v1314
        %1889 = vmatprep.subr.mxu0 0.0
        %1890 = vmatpush1.msra.mxu0 %v1315
        %1891 = vmatprep.subr.mxu0 0.0
        %1892 = vmatpush1.msra.mxu0 %v1316
        %1893 = vmatprep.subr.mxu0 0.0
        %1894 = vmatpush1.msra.mxu0 %v1317
        %1895 = vmatprep.subr.mxu0 0.0
        %1896 = vmatpush1.msra.mxu0 %v1318
        %1897 = vmatprep.subr.mxu0 0.0
        %1898 = vmatpush1.msra.mxu0 0.0
        %1899 = vmatprep.subr.mxu0 0.0
        %1900 = vmatpush1.msra.mxu0 0.0
        %1901 = vmatprep.subr.mxu0 0.0
        %1902 = vmatpush1.msra.mxu0 0.0
        %1903 = vmatprep.subr.mxu0 0.0
        %1904 = vmatpush1.msra.mxu0 0.0
        %1905 = vmatprep.subr.mxu0 0.0
        %1906 = vmatpush1.msra.mxu0 0.0
        %1907 = vmatprep.subr.mxu0 0.0
        %1908 = vmatpush1.msra.mxu0 0.0
        %1909 = vmatprep.subr.mxu0 0.0
        %1910 = vmatpush1.msra.mxu0 0.0
        %1911 = vmatprep.subr.mxu0 0.0
        %1912 = vmatpush1.msra.mxu0 0.0
        %1913 = vmatprep.subr.mxu0 0.0
        %1914 = vmatpush1.msra.mxu0 0.0
        %1915 = vmatprep.subr.mxu0 0.0
        %1916 = vmatpush1.msra.mxu0 0.0
        %1917 = vmatprep.subr.mxu0 0.0
        %1918 = vmatpush1.msra.mxu0 0.0
        %1919 = vmatprep.subr.mxu0 0.0
        %1920 = vmatpush1.msra.mxu0 0.0
        %1921 = vmatprep.subr.mxu0 0.0
        %1922 = vmatpush1.msra.mxu0 0.0
        %1923 = vmatprep.subr.mxu0 0.0
        %1924 = vmatpush1.msra.mxu0 0.0
        %1925 = vmatprep.subr.mxu0 0.0
        %1926 = vmatpush1.msra.mxu0 0.0
        %1927 = vmatprep.subr.mxu0 0.0
        %1928 = vmatpush1.msra.mxu0 0.0
        %1929 = vmatprep.mubr.f32.mxu0 0.0
        %1930 = vmatmul.mubr.f32.gmra.mrb[0].mxu0 %v1863
        %v1931 = vpop.f32.mrb[0].mxu0
        %v1932 = vadd.f32 0.0, %v1931
        %v1933 = vpop.f32.mrb[0].mxu0
        %1934 = vdwg.mxu0
        %v1935 = vadd.f32 %v1864, %v1932
        %v1936 = vtanh.pop %v1935
        %v1937 = vld [vmem:[%s1126] sm:$0x3]
        %1938 = vmatprep.subr.mxu0 0.0
        %1939 = vmatpush1.msra.mxu0 %v1303
        %1940 = vmatprep.subr.mxu0 0.0
        %1941 = vmatpush1.msra.mxu0 %v1304
        %1942 = vmatprep.subr.mxu0 0.0
        %1943 = vmatpush1.msra.mxu0 %v1305
        %1944 = vmatprep.subr.mxu0 0.0
        %1945 = vmatpush1.msra.mxu0 %v1306
        %1946 = vmatprep.subr.mxu0 0.0
        %1947 = vmatpush1.msra.mxu0 %v1307
        %1948 = vmatprep.subr.mxu0 0.0
        %1949 = vmatpush1.msra.mxu0 %v1308
        %1950 = vmatprep.subr.mxu0 0.0
        %1951 = vmatpush1.msra.mxu0 %v1309
        %1952 = vmatprep.subr.mxu0 0.0
        %1953 = vmatpush1.msra.mxu0 %v1310
        %1954 = vmatprep.subr.mxu0 0.0
        %1955 = vmatpush1.msra.mxu0 %v1311
        %1956 = vmatprep.subr.mxu0 0.0
        %1957 = vmatpush1.msra.mxu0 %v1312
        %1958 = vmatprep.subr.mxu0 0.0
        %1959 = vmatpush1.msra.mxu0 %v1313
        %1960 = vmatprep.subr.mxu0 0.0
        %1961 = vmatpush1.msra.mxu0 %v1314
        %1962 = vmatprep.subr.mxu0 0.0
        %1963 = vmatpush1.msra.mxu0 %v1315
        %1964 = vmatprep.subr.mxu0 0.0
        %1965 = vmatpush1.msra.mxu0 %v1316
        %1966 = vmatprep.subr.mxu0 0.0
        %1967 = vmatpush1.msra.mxu0 %v1317
        %1968 = vmatprep.subr.mxu0 0.0
        %1969 = vmatpush1.msra.mxu0 %v1318
        %1970 = vmatprep.subr.mxu0 0.0
        %1971 = vmatpush1.msra.mxu0 0.0
        %1972 = vmatprep.subr.mxu0 0.0
        %1973 = vmatpush1.msra.mxu0 0.0
        %1974 = vmatprep.subr.mxu0 0.0
        %1975 = vmatpush1.msra.mxu0 0.0
        %1976 = vmatprep.subr.mxu0 0.0
        %1977 = vmatpush1.msra.mxu0 0.0
        %1978 = vmatprep.subr.mxu0 0.0
        %1979 = vmatpush1.msra.mxu0 0.0
        %1980 = vmatprep.subr.mxu0 0.0
        %1981 = vmatpush1.msra.mxu0 0.0
        %1982 = vmatprep.subr.mxu0 0.0
        %1983 = vmatpush1.msra.mxu0 0.0
        %1984 = vmatprep.subr.mxu0 0.0
        %1985 = vmatpush1.msra.mxu0 0.0
        %1986 = vmatprep.subr.mxu0 0.0
        %1987 = vmatpush1.msra.mxu0 0.0
        %1988 = vmatprep.subr.mxu0 0.0
        %1989 = vmatpush1.msra.mxu0 0.0
        %1990 = vmatprep.subr.mxu0 0.0
        %1991 = vmatpush1.msra.mxu0 0.0
        %1992 = vmatprep.subr.mxu0 0.0
        %1993 = vmatpush1.msra.mxu0 0.0
        %1994 = vmatprep.subr.mxu0 0.0
        %1995 = vmatpush1.msra.mxu0 0.0
        %1996 = vmatprep.subr.mxu0 0.0
        %1997 = vmatpush1.msra.mxu0 0.0
        %1998 = vmatprep.subr.mxu0 0.0
        %1999 = vmatpush1.msra.mxu0 0.0
        %2000 = vmatprep.subr.mxu0 0.0
        %2001 = vmatpush1.msra.mxu0 0.0
        %2002 = vmatprep.mubr.f32.mxu0 0.0
        %2003 = vmatmul.mubr.f32.gmra.mrb[0].mxu0 %v1936
        %v2004 = vpop.f32.mrb[0].mxu0
        %v2005 = vadd.f32 0.0, %v2004
        %v2006 = vpop.f32.mrb[0].mxu0
        %2007 = vdwg.mxu0
        %v2008 = vadd.f32 %v1937, %v2005
        %v2009 = vtanh.pop %v2008
        %v2010 = vld [vmem:[%s1202] sm:$0x3]
        %2011 = vmatprep.subr.mxu0 0.0
        %2012 = vmatpush1.msra.mxu0 %v1303
        %2013 = vmatprep.subr.mxu0 0.0
        %2014 = vmatpush1.msra.mxu0 %v1304
        %2015 = vmatprep.subr.mxu0 0.0
        %2016 = vmatpush1.msra.mxu0 %v1305
        %2017 = vmatprep.subr.mxu0 0.0
        %2018 = vmatpush1.msra.mxu0 %v1306
        %2019 = vmatprep.subr.mxu0 0.0
        %2020 = vmatpush1.msra.mxu0 %v1307
        %2021 = vmatprep.subr.mxu0 0.0
        %2022 = vmatpush1.msra.mxu0 %v1308
        %2023 = vmatprep.subr.mxu0 0.0
        %2024 = vmatpush1.msra.mxu0 %v1309
        %2025 = vmatprep.subr.mxu0 0.0
        %2026 = vmatpush1.msra.mxu0 %v1310
        %2027 = vmatprep.subr.mxu0 0.0
        %2028 = vmatpush1.msra.mxu0 %v1311
        %2029 = vmatprep.subr.mxu0 0.0
        %2030 = vmatpush1.msra.mxu0 %v1312
        %2031 = vmatprep.subr.mxu0 0.0
        %2032 = vmatpush1.msra.mxu0 %v1313
        %2033 = vmatprep.subr.mxu0 0.0
        %2034 = vmatpush1.msra.mxu0 %v1314
        %2035 = vmatprep.subr.mxu0 0.0
        %2036 = vmatpush1.msra.mxu0 %v1315
        %2037 = vmatprep.subr.mxu0 0.0
        %2038 = vmatpush1.msra.mxu0 %v1316
        %2039 = vmatprep.subr.mxu0 0.0
        %2040 = vmatpush1.msra.mxu0 %v1317
        %2041 = vmatprep.subr.mxu0 0.0
        %2042 = vmatpush1.msra.mxu0 %v1318
        %2043 = vmatprep.subr.mxu0 0.0
        %2044 = vmatpush1.msra.mxu0 0.0
        %2045 = vmatprep.subr.mxu0 0.0
        %2046 = vmatpush1.msra.mxu0 0.0
        %2047 = vmatprep.subr.mxu0 0.0
        %2048 = vmatpush1.msra.mxu0 0.0
        %2049 = vmatprep.subr.mxu0 0.0
        %2050 = vmatpush1.msra.mxu0 0.0
        %2051 = vmatprep.subr.mxu0 0.0
        %2052 = vmatpush1.msra.mxu0 0.0
        %2053 = vmatprep.subr.mxu0 0.0
        %2054 = vmatpush1.msra.mxu0 0.0
        %2055 = vmatprep.subr.mxu0 0.0
        %2056 = vmatpush1.msra.mxu0 0.0
        %2057 = vmatprep.subr.mxu0 0.0
        %2058 = vmatpush1.msra.mxu0 0.0
        %2059 = vmatprep.subr.mxu0 0.0
        %2060 = vmatpush1.msra.mxu0 0.0
        %2061 = vmatprep.subr.mxu0 0.0
        %2062 = vmatpush1.msra.mxu0 0.0
        %2063 = vmatprep.subr.mxu0 0.0
        %2064 = vmatpush1.msra.mxu0 0.0
        %2065 = vmatprep.subr.mxu0 0.0
        %2066 = vmatpush1.msra.mxu0 0.0
        %2067 = vmatprep.subr.mxu0 0.0
        %2068 = vmatpush1.msra.mxu0 0.0
        %2069 = vmatprep.subr.mxu0 0.0
        %2070 = vmatpush1.msra.mxu0 0.0
        %2071 = vmatprep.subr.mxu0 0.0
        %2072 = vmatpush1.msra.mxu0 0.0
        %2073 = vmatprep.subr.mxu0 0.0
        %2074 = vmatpush1.msra.mxu0 0.0
        %2075 = vmatprep.mubr.f32.mxu0 0.0
        %2076 = vmatmul.mubr.f32.gmra.mrb[0].mxu0 %v2009
        %v2077 = vpop.f32.mrb[0].mxu0
        %v2078 = vadd.f32 0.0, %v2077
        %v2079 = vpop.f32.mrb[0].mxu0
        %2080 = vdwg.mxu0
        %v2081 = vadd.f32 %v2010, %v2078
        %v2082 = vtanh.pop %v2081
        %2083 = vst [vmem:[%s1497] sm:$0x3] %v2082
        %p2084 = scmp.eq.s32.totalorder %s34, 1
        // Predicated region
        $region85: #{tpu_custom_call.1} parent=59 // pred_check
          %p2085 = pneg %p2084
        $region86: #{tpu_custom_call.1} parent=59 // pred_check_branch
          %2087 = sbr.rel (%p2085) target = $region88
        $region87: #{tpu_custom_call.1} parent=59 // pred_region
          %v2088 = vld [vmem:[%s8] sm:$0xff]
          %v2089 = vld [vmem:[%s8 + $0x8] sm:$0xff]
          %v2090 = vld [vmem:[%s8 + $0x10] sm:$0xff]
          %v2091 = vld [vmem:[%s8 + $0x18] sm:$0xff]
          %v2092 = vld [vmem:[%s8 + $0x20] sm:$0xff]
          %v2093 = vld [vmem:[%s8 + $0x28] sm:$0xff]
          %v2094 = vld [vmem:[%s8 + $0x30] sm:$0xff]
          %v2095 = vld [vmem:[%s8 + $0x38] sm:$0xff]
          %v2096 = vld [vmem:[%s8 + $0x40] sm:$0xff]
          %v2097 = vld [vmem:[%s8 + $0x48] sm:$0xff]
          %v2098 = vld [vmem:[%s8 + $0x50] sm:$0xff]
          %v2099 = vld [vmem:[%s8 + $0x58] sm:$0xff]
          %v2100 = vld [vmem:[%s8 + $0x60] sm:$0xff]
          %v2101 = vld [vmem:[%s8 + $0x68] sm:$0xff]
          %v2102 = vld [vmem:[%s8 + $0x70] sm:$0xff]
          %v2103 = vld [vmem:[%s8 + $0x78] sm:$0xff]
          %v2104 = vld [vmem:[%s9] sm:$0x1]
          %v2106 = vlaneseq
          %v2107 = vshrl.u32 %v2106, 7
          %v2108 = vsub.s32 0, %v2107
          %v2109 = vrot.slane %v2104, %v2108
          %2111 = vmatprep.subr.mxu0 0.0
          %2112 = vmatpush1.msra.mxu0 %v2088
          %2113 = vmatprep.subr.mxu0 0.0
          %2114 = vmatpush1.msra.mxu0 %v2089
          %2115 = vmatprep.subr.mxu0 0.0
          %2116 = vmatpush1.msra.mxu0 %v2090
          %2117 = vmatprep.subr.mxu0 0.0
          %2118 = vmatpush1.msra.mxu0 %v2091
          %2119 = vmatprep.subr.mxu0 0.0
          %2120 = vmatpush1.msra.mxu0 %v2092
          %2121 = vmatprep.subr.mxu0 0.0
          %2122 = vmatpush1.msra.mxu0 %v2093
          %2123 = vmatprep.subr.mxu0 0.0
          %2124 = vmatpush1.msra.mxu0 %v2094
          %2125 = vmatprep.subr.mxu0 0.0
          %2126 = vmatpush1.msra.mxu0 %v2095
          %2127 = vmatprep.subr.mxu0 0.0
          %2128 = vmatpush1.msra.mxu0 %v2096
          %2129 = vmatprep.subr.mxu0 0.0
          %2130 = vmatpush1.msra.mxu0 %v2097
          %2131 = vmatprep.subr.mxu0 0.0
          %2132 = vmatpush1.msra.mxu0 %v2098
          %2133 = vmatprep.subr.mxu0 0.0
          %2134 = vmatpush1.msra.mxu0 %v2099
          %2135 = vmatprep.subr.mxu0 0.0
          %2136 = vmatpush1.msra.mxu0 %v2100
          %2137 = vmatprep.subr.mxu0 0.0
          %2138 = vmatpush1.msra.mxu0 %v2101
          %2139 = vmatprep.subr.mxu0 0.0
          %2140 = vmatpush1.msra.mxu0 %v2102
          %2141 = vmatprep.subr.mxu0 0.0
          %2142 = vmatpush1.msra.mxu0 %v2103
          %2143 = vmatprep.subr.mxu0 0.0
          %2144 = vmatpush1.msra.mxu0 0.0
          %2145 = vmatprep.subr.mxu0 0.0
          %2146 = vmatpush1.msra.mxu0 0.0
          %2147 = vmatprep.subr.mxu0 0.0
          %2148 = vmatpush1.msra.mxu0 0.0
          %2149 = vmatprep.subr.mxu0 0.0
          %2150 = vmatpush1.msra.mxu0 0.0
          %2151 = vmatprep.subr.mxu0 0.0
          %2152 = vmatpush1.msra.mxu0 0.0
          %2153 = vmatprep.subr.mxu0 0.0
          %2154 = vmatpush1.msra.mxu0 0.0
          %2155 = vmatprep.subr.mxu0 0.0
          %2156 = vmatpush1.msra.mxu0 0.0
          %2157 = vmatprep.subr.mxu0 0.0
          %2158 = vmatpush1.msra.mxu0 0.0
          %2159 = vmatprep.subr.mxu0 0.0
          %2160 = vmatpush1.msra.mxu0 0.0
          %2161 = vmatprep.subr.mxu0 0.0
          %2162 = vmatpush1.msra.mxu0 0.0
          %2163 = vmatprep.subr.mxu0 0.0
          %2164 = vmatpush1.msra.mxu0 0.0
          %2165 = vmatprep.subr.mxu0 0.0
          %2166 = vmatpush1.msra.mxu0 0.0
          %2167 = vmatprep.subr.mxu0 0.0
          %2168 = vmatpush1.msra.mxu0 0.0
          %2169 = vmatprep.subr.mxu0 0.0
          %2170 = vmatpush1.msra.mxu0 0.0
          %2171 = vmatprep.subr.mxu0 0.0
          %2172 = vmatpush1.msra.mxu0 0.0
          %2173 = vmatprep.subr.mxu0 0.0
          %2174 = vmatpush1.msra.mxu0 0.0
          %2175 = vmatprep.mubr.f32.mxu0 0.0
          %2176 = vmatmul.mubr.f32.gmra.mrb[0].mxu0 %v2082
          %v2177 = vpop.f32.mrb[0].mxu0
          %v2178 = vadd.f32 %v2109, %v2177
          %v2179 = vpop.f32.mrb[0].mxu0
          %2180 = vdwg.mxu0
          %vm2181 = vcmask 25600
          %2182 = vst.msk [vmem:[#allocation14] sm:$0x3] %vm2181, %v2178
        $region88: #{tpu_custom_call.1} parent=59 // pred_fallthru
          _
        // Predicated region
        $region89: #{tpu_custom_call.1} parent=59 // pred_check
          %p2183 = pneg %p283
        $region90: #{tpu_custom_call.1} parent=59 // pred_check_branch
          %2185 = sbr.rel (%p2183) target = $region92
        $region91: #{tpu_custom_call.1} parent=59 // pred_region
          %s2187 = ssub.s32 32, 32
          %2188 = vsyncadd [#allocation7], %s2187
          %s2189 = smul.addr %s33, 32
          %s2190 = scalar_lea.hbm %s10, %s2189
          %s2192 = sshll.u32 [#allocation14], 4
          %s2193 = int_to_ptr.vmem [resolvable:$true] %s2192
          %2195 = dma.vmem_to_hbm [thread:$0]  %s2193, 32, %s2190, [#allocation7]
        $region92: #{tpu_custom_call.1} parent=59 // pred_fallthru
          _
        // Predicated region
        $region93: #{tpu_custom_call.1} parent=59 // pred_check
          %p2196 = pneg %p283
        $region94: #{tpu_custom_call.1} parent=59 // pred_check_branch
          %2198 = sbr.rel (%p2196) target = $region96
        $region95: #{tpu_custom_call.1} parent=59 // pred_region
          %2199 = dma.done [#allocation7], 32
        $region96: #{tpu_custom_call.1} parent=59 // pred_fallthru
          _
      $region60: #{tpu_custom_call.1} parent=5 // pred_fallthru
        _
      %p2200 = scmp.le.s32.totalorder 2, %s24
      // Predicated region
      $region97: #{tpu_custom_call.1} parent=5 // pred_check
        %p2201 = pneg %p2200
      $region98: #{tpu_custom_call.1} parent=5 // pred_check_branch
        %2203 = sbr.rel (%p2201) target = $region100
      $region99: #{tpu_custom_call.1} parent=5 // pred_region
        %s2204 = ssub.s32 %s24, 2
      $region100: #{tpu_custom_call.1} parent=5 // pred_fallthru
        _
    $region6: #{tpu_custom_call.1} parent=1 // loop_footer
      %s28 = sadd.s32 1, %s24
    $region7: #{tpu_custom_call.1} parent=1 // loop_footer_branch
      %23 = sbr.rel target = $region3
    $region8: #{tpu_custom_call.1} parent=1 // loop_exit
      _
    %2205 = vsyncpa [#allocation6], 1
    %s2206 = scalar_lea.sflag [#allocation6], 1
    %2207 = vsyncpa %s2206, 1
    %2208 = vsyncpa [#allocation9], 1
    %s2209 = scalar_lea.sflag [#allocation9], 1
    %2210 = vsyncpa %s2209, 1
    %2211 = vsyncpa [#allocation12], 1
    %2212 = vsyncpa [#allocation7], 1
    %s2213 = scalar_lea.sflag [#allocation7], 1
    %2214 = vsyncpa %s2213, 1

</llo_original>
